<compile_context>
chip_gen: v7x
topology: tpu7x:2x2x1
jax: 0.10.0
libtpu: 0.0.40
codegen_flags: <defaults>
</compile_context>

<pallas_src>
import functools

import jax
import jax.numpy as jnp
from jax.experimental import pallas as pl
from jax.experimental.pallas import tpu as pltpu


# ----------------------------------------------------------------------
# Fully fused ConvAttention kernel: one grid step = one batch element.
# ----------------------------------------------------------------------
def _conv_attention_kernel(x_ref, wqkv_ref, wproj_ref, bproj_ref, o_ref,
                           xpad_ref, xcol_ref, oacc_ref, *,
                           H, W, num_heads, compute_dtype):
    # x_ref:     (1, H, W, C)  unpadded f32 image for this batch element
    # wqkv_ref:  (9*C, 3*C)    folded conv(3x3)+qkv-Linear im2col weight (bf16)
    # wproj_ref: (C, C)        output projection weight, (C_in, C_out) (bf16)
    # bproj_ref: (1, C)        output projection bias (f32)
    # o_ref:     (1, N, C)     output tokens, N = H*W
    # xpad_ref:  (H+2, W+2, C) VMEM scratch, halo-padded bf16 image
    # xcol_ref:  (N, 9*C)      VMEM scratch, im2col matrix (bf16)
    # oacc_ref:  (N, C)        VMEM scratch, merged per-head attention output (f32)
    C = wproj_ref.shape[0]
    N = H * W
    hd = C // num_heads

    # ---- 1. halo padding in VMEM (no wrapper pad+cast HBM round trip) -------
    # Zero every step (only (H+2)*(W+2)*C elems) so correctness never depends
    # on which TensorCore of a megacore chip executed grid step 0.
    xpad_ref[...] = jnp.zeros_like(xpad_ref)
    xpad_ref[1:H + 1, 1:W + 1, :] = x_ref[0].astype(compute_dtype)

    # ---- 2. im2col: 9 static slice stores into scratch (no lane concat) -----
    for t in range(9):
        kh, kw = divmod(t, 3)
        xcol_ref[:, t * C:(t + 1) * C] = (
            xpad_ref[kh:kh + H, kw:kw + W, :].reshape(N, C))

    # ---- 3. fused q/k/v: single (N, 9C) @ (9C, 3C) MXU matmul, f32 acc ------
    qkv = jnp.dot(xcol_ref[...], wqkv_ref[...],
                  preferred_element_type=jnp.float32)            # (N, 3C) f32
    q_all = qkv[:, 0 * C:1 * C]   # already scaled by head_dim**-0.5 (offline fold)
    k_all = qkv[:, 1 * C:2 * C]
    v_all = qkv[:, 2 * C:3 * C]

    # ---- 4. multi-head attention, deferred softmax normalisation ------------
    for h in range(num_heads):
        sl = slice(h * hd, (h + 1) * hd)
        qh = q_all[:, sl].astype(compute_dtype)
        kh_ = k_all[:, sl].astype(compute_dtype)
        vh = v_all[:, sl].astype(compute_dtype)
        # q @ k^T via dot_general contracting on head_dim (no explicit k.T).
        s = jax.lax.dot_general(qh, kh_, (((1,), (1,)), ((), ())),
                                preferred_element_type=jnp.float32)   # (N, N)
        m = jnp.max(s, axis=-1, keepdims=True)
        p = jnp.exp(s - m)                                            # unnormalised
        l = jnp.sum(p, axis=-1, keepdims=True)
        oh = jnp.dot(p.astype(compute_dtype), vh,
                     preferred_element_type=jnp.float32)              # (N, hd)
        # Normalise the (N, hd) result instead of the (N, N) probabilities.
        oacc_ref[:, sl] = oh * pl.reciprocal(l, approx=True)

    # ---- 5. output projection (bias=True); dropouts are p=0.0 -> identity ---
    y = jnp.dot(oacc_ref[...].astype(compute_dtype), wproj_ref[...],
                preferred_element_type=jnp.float32)                   # (N, C)
    y = y + bproj_ref[...]
    o_ref[0] = y.astype(o_ref.dtype)


# ----------------------------------------------------------------------
# Wrapper: one pallas_call for the whole forward.
# ----------------------------------------------------------------------
def conv_attention(x, H, W, params, num_heads, compute_dtype=jnp.bfloat16):
    """Fused ConvAttention forward.  x: (B, N, C) float32 with N == H*W."""
    B, N, C = x.shape
    assert N == H * W and C % num_heads == 0
    hd = C // num_heads

    # Free metadata reshape only; padding + bf16 cast happen inside the kernel,
    # so x is read from HBM exactly once (f32) with no extra wrapper pass.
    x4 = x.reshape(B, H, W, C)

    w_qkv = params["w_qkv_fused"].astype(compute_dtype)        # (9C, 3C)
    w_proj = params["w_proj"].astype(compute_dtype)            # (C, C)
    b_proj = params["b_proj"].reshape(1, C).astype(jnp.float32)

    kern = functools.partial(
        _conv_attention_kernel, H=H, W=W, num_heads=num_heads,
        compute_dtype=compute_dtype)

    # Advisory cost estimate so XLA can schedule surrounding ops around the call.
    flops_per_b = (2 * N * (9 * C) * (3 * C)          # fused qkv matmul
                   + num_heads * 4 * N * N * hd       # QK^T + PV per head
                   + 2 * N * C * C)                   # output projection
    bytes_accessed = (B * N * C * x.dtype.itemsize    # x read
                      + B * N * C * 4                 # output write
                      + (9 * C * 3 * C + C * C) * 2 + C * 4)   # weights
    cost = pl.CostEstimate(flops=B * flops_per_b,
                           transcendentals=B * num_heads * N * N,
                           bytes_accessed=bytes_accessed)

    return pl.pallas_call(
        kern,
        out_shape=jax.ShapeDtypeStruct((B, N, C), x.dtype),
        grid=(B,),
        in_specs=[
            pl.BlockSpec((1, H, W, C), lambda b: (b, 0, 0, 0)),
            pl.BlockSpec((9 * C, 3 * C), lambda b: (0, 0)),
            pl.BlockSpec((C, C), lambda b: (0, 0)),
            pl.BlockSpec((1, C), lambda b: (0, 0)),
        ],
        out_specs=pl.BlockSpec((1, N, C), lambda b: (b, 0, 0)),
        scratch_shapes=[
            pltpu.VMEM((H + 2, W + 2, C), compute_dtype),   # halo-padded image
            pltpu.VMEM((N, 9 * C), compute_dtype),          # im2col matrix
            pltpu.VMEM((N, C), jnp.float32),                # merged head outputs
        ],
        compiler_params=pltpu.CompilerParams(
            dimension_semantics=("parallel",),
            # Raise the scoped-VMEM limit above the 16 MiB v5e default; re-derive
            # the per-step budget when scaling to production CvT shapes.
            vmem_limit_bytes=32 * 1024 * 1024),
        cost_estimate=cost,
    )(x4, w_qkv, w_proj, b_proj)


# ----------------------------------------------------------------------
# Deterministic synthetic parameters + offline weight folding.
# ----------------------------------------------------------------------
def init_params(key, C):
    """Synthetic parameters in pre-permuted layout:
    conv weights (kh, kw, C_in, C_out); linear weights (C_in, C_out) = W^T."""
    ks = jax.random.split(key, 8)
    s = 0.05
    return {
        "wq_conv": jax.random.normal(ks[0], (3, 3, C, C), jnp.float32) * s,
        "wk_conv": jax.random.normal(ks[1], (3, 3, C, C), jnp.float32) * s,
        "wv_conv": jax.random.normal(ks[2], (3, 3, C, C), jnp.float32) * s,
        "wq_lin": jax.random.normal(ks[3], (C, C), jnp.float32) * s,
        "wk_lin": jax.random.normal(ks[4], (C, C), jnp.float32) * s,
        "wv_lin": jax.random.normal(ks[5], (C, C), jnp.float32) * s,
        "w_proj": jax.random.normal(ks[6], (C, C), jnp.float32) * s,
        "b_proj": jax.random.normal(ks[7], (C,), jnp.float32) * s,
    }


def fuse_params(raw, C, num_heads):
    """Fold conv_proj_{q,k,v} followed by proj_{q,k,v} (both bias-free linear
    maps) into a single im2col weight (9*C, 3*C).  The attention scale
    head_dim**-0.5 is folded into the q columns (true offline weight fold)."""
    scale = (C // num_heads) ** (-0.5)

    def fold(wc, wl):                                      # (3,3,C,C)@(C,C)
        return jnp.einsum('hwio,od->hwid', wc, wl)

    w = jnp.concatenate(
        [fold(raw["wq_conv"], raw["wq_lin"]) * scale,
         fold(raw["wk_conv"], raw["wk_lin"]),
         fold(raw["wv_conv"], raw["wv_lin"])], axis=-1)    # (3, 3, C, 3C)
    return {
        "w_qkv_fused": w.reshape(9 * C, 3 * C),
        "w_proj": raw["w_proj"],
        "b_proj": raw["b_proj"],
    }


# ----------------------------------------------------------------------
# Pure-JAX reference mirroring the PyTorch forward (for a loose parity check).
# ----------------------------------------------------------------------
def reference_forward(x, raw, H, W, num_heads):
    B, N, C = x.shape
    hd = C // num_heads
    scale = hd ** (-0.5)
    xp = jnp.pad(x.reshape(B, H, W, C), ((0, 0), (1, 1), (1, 1), (0, 0)))
    dn = ('NHWC', 'HWIO', 'NHWC')

    def branch(wc, wl):
        c = jax.lax.conv_general_dilated(xp, wc, (1, 1), 'VALID',
                                         dimension_numbers=dn)
        return c.reshape(B, N, C) @ wl

    q = branch(raw["wq_conv"], raw["wq_lin"])
    k = branch(raw["wk_conv"], raw["wk_lin"])
    v = branch(raw["wv_conv"], raw["wv_lin"])

    def split(t):
        return t.reshape(B, N, num_heads, hd).transpose(0, 2, 1, 3)

    qh, kh, vh = split(q), split(k), split(v)
    attn = jax.nn.softmax(jnp.einsum('bhqd,bhkd->bhqk', qh, kh) * scale, axis=-1)
    o = jnp.einsum('bhqk,bhkd->bhqd', attn, vh).transpose(0, 2, 1, 3).reshape(B, N, C)
    return o @ raw["w_proj"] + raw["b_proj"]


if __name__ == "__main__":
    key = jax.random.PRNGKey(0)
    k_x, k_p = jax.random.split(key)

    B, C, H, W = 2, 32, 8, 8
    num_heads = 4
    N = H * W

    x = jax.random.normal(k_x, (B, N, C), jnp.float32)
    raw = init_params(k_p, C)
    params = fuse_params(raw, C, num_heads)

    out = jax.block_until_ready(conv_attention(x, H, W, params, num_heads))

    assert out.shape == (B, N, C), out.shape
    assert bool(jnp.all(jnp.isfinite(out)))

    # Loose parity vs. the f32 reference (bf16 MXU + approx-reciprocal softmax).
    ref = reference_forward(x, raw, H, W, num_heads)
    max_err = float(jnp.max(jnp.abs(out - ref)))
    assert max_err < 5e-2, max_err

    print("KERNEL_OK")
</pallas_src>

<mosaic_0001>
module attributes {stable_mosaic.version = 11 : i64} {
  func.func @_conv_attention_kernel(%arg0: i32, %arg1: memref<1x8x8x32xf32, #tpu.memory_space<vmem>>, %arg2: memref<288x96xbf16, #tpu.memory_space<vmem>>, %arg3: memref<32x32xbf16, #tpu.memory_space<vmem>>, %arg4: memref<1x32xf32, #tpu.memory_space<vmem>>, %arg5: memref<1x64x32xf32, #tpu.memory_space<vmem>>, %arg6: memref<10x10x32xbf16, #tpu.memory_space<vmem>>, %arg7: memref<64x288xbf16, #tpu.memory_space<vmem>>, %arg8: memref<64x32xf32, #tpu.memory_space<vmem>>) attributes {dimension_semantics = [#tpu.dimension_semantics<parallel>], iteration_bounds = array<i64: 2>, scalar_prefetch = 0 : i64, scratch_operands = 3 : i64, tpu.core_type = #tpu.core_type<tc>, window_params = [{transform_indices = @transform_0, window_bounds = array<i64: 1, 8, 8, 32>}, {pipeline_mode = #tpu.pipeline_mode<synchronous>, transform_indices = @transform_1, window_bounds = array<i64: 288, 96>}, {pipeline_mode = #tpu.pipeline_mode<synchronous>, transform_indices = @transform_2, window_bounds = array<i64: 32, 32>}, {pipeline_mode = #tpu.pipeline_mode<synchronous>, transform_indices = @transform_3, window_bounds = array<i64: 1, 32>}, {transform_indices = @transform_4, window_bounds = array<i64: 1, 64, 32>}]} {
    %cst = arith.constant 0.000000e+00 : bf16
    %0 = vector.broadcast %cst : bf16 to vector<10x10x32xbf16>
    %c0 = arith.constant 0 : index
    %c0_0 = arith.constant 0 : index
    %c0_1 = arith.constant 0 : index
    %1 = vector.load %arg6[%c0, %c0_0, %c0_1] : memref<10x10x32xbf16, #tpu.memory_space<vmem>>, vector<10x10x32xbf16>
    tpu.vector_store %arg6[%c0, %c0_0, %c0_1], %0 {strides = array<i32>} : memref<10x10x32xbf16, #tpu.memory_space<vmem>>, vector<10x10x32xbf16>,
    %c0_2 = arith.constant 0 : index
    %c0_3 = arith.constant 0 : index
    %c0_4 = arith.constant 0 : index
    %c0_5 = arith.constant 0 : index
    %2 = vector.load %arg1[%c0_2, %c0_3, %c0_4, %c0_5] : memref<1x8x8x32xf32, #tpu.memory_space<vmem>>, vector<1x8x8x32xf32>
    %3 = vector.shape_cast %2 : vector<1x8x8x32xf32> to vector<8x8x32xf32>
    %4 = arith.truncf %3 : vector<8x8x32xf32> to vector<8x8x32xbf16>
    %c1 = arith.constant 1 : index
    %c1_6 = arith.constant 1 : index
    %c0_7 = arith.constant 0 : index
    %5 = vector.load %arg6[%c1, %c1_6, %c0_7] : memref<10x10x32xbf16, #tpu.memory_space<vmem>>, vector<8x8x32xbf16>
    tpu.vector_store %arg6[%c1, %c1_6, %c0_7], %4 {strides = array<i32>} : memref<10x10x32xbf16, #tpu.memory_space<vmem>>, vector<8x8x32xbf16>,
    %c0_8 = arith.constant 0 : index
    %c0_9 = arith.constant 0 : index
    %c0_10 = arith.constant 0 : index
    %6 = vector.load %arg6[%c0_8, %c0_9, %c0_10] : memref<10x10x32xbf16, #tpu.memory_space<vmem>>, vector<8x8x32xbf16>
    %7 = vector.shape_cast %6 : vector<8x8x32xbf16> to vector<64x32xbf16>
    %c0_11 = arith.constant 0 : index
    %c0_12 = arith.constant 0 : index
    %8 = vector.load %arg7[%c0_11, %c0_12] : memref<64x288xbf16, #tpu.memory_space<vmem>>, vector<64x32xbf16>
    tpu.vector_store %arg7[%c0_11, %c0_12], %7 {strides = array<i32>} : memref<64x288xbf16, #tpu.memory_space<vmem>>, vector<64x32xbf16>,
    %c0_13 = arith.constant 0 : index
    %c1_14 = arith.constant 1 : index
    %c0_15 = arith.constant 0 : index
    %9 = vector.load %arg6[%c0_13, %c1_14, %c0_15] : memref<10x10x32xbf16, #tpu.memory_space<vmem>>, vector<8x8x32xbf16>
    %10 = vector.shape_cast %9 : vector<8x8x32xbf16> to vector<64x32xbf16>
    %c0_16 = arith.constant 0 : index
    %c32 = arith.constant 32 : index
    %11 = vector.load %arg7[%c0_16, %c32] : memref<64x288xbf16, #tpu.memory_space<vmem>>, vector<64x32xbf16>
    tpu.vector_store %arg7[%c0_16, %c32], %10 {strides = array<i32>} : memref<64x288xbf16, #tpu.memory_space<vmem>>, vector<64x32xbf16>,
    %c0_17 = arith.constant 0 : index
    %c2 = arith.constant 2 : index
    %c0_18 = arith.constant 0 : index
    %12 = vector.load %arg6[%c0_17, %c2, %c0_18] : memref<10x10x32xbf16, #tpu.memory_space<vmem>>, vector<8x8x32xbf16>
    %13 = vector.shape_cast %12 : vector<8x8x32xbf16> to vector<64x32xbf16>
    %c0_19 = arith.constant 0 : index
    %c64 = arith.constant 64 : index
    %14 = vector.load %arg7[%c0_19, %c64] : memref<64x288xbf16, #tpu.memory_space<vmem>>, vector<64x32xbf16>
    tpu.vector_store %arg7[%c0_19, %c64], %13 {strides = array<i32>} : memref<64x288xbf16, #tpu.memory_space<vmem>>, vector<64x32xbf16>,
    %c1_20 = arith.constant 1 : index
    %c0_21 = arith.constant 0 : index
    %c0_22 = arith.constant 0 : index
    %15 = vector.load %arg6[%c1_20, %c0_21, %c0_22] : memref<10x10x32xbf16, #tpu.memory_space<vmem>>, vector<8x8x32xbf16>
    %16 = vector.shape_cast %15 : vector<8x8x32xbf16> to vector<64x32xbf16>
    %c0_23 = arith.constant 0 : index
    %c96 = arith.constant 96 : index
    %17 = vector.load %arg7[%c0_23, %c96] : memref<64x288xbf16, #tpu.memory_space<vmem>>, vector<64x32xbf16>
    tpu.vector_store %arg7[%c0_23, %c96], %16 {strides = array<i32>} : memref<64x288xbf16, #tpu.memory_space<vmem>>, vector<64x32xbf16>,
    %c1_24 = arith.constant 1 : index
    %c1_25 = arith.constant 1 : index
    %c0_26 = arith.constant 0 : index
    %18 = vector.load %arg6[%c1_24, %c1_25, %c0_26] : memref<10x10x32xbf16, #tpu.memory_space<vmem>>, vector<8x8x32xbf16>
    %19 = vector.shape_cast %18 : vector<8x8x32xbf16> to vector<64x32xbf16>
    %c0_27 = arith.constant 0 : index
    %c128 = arith.constant 128 : index
    %20 = vector.load %arg7[%c0_27, %c128] : memref<64x288xbf16, #tpu.memory_space<vmem>>, vector<64x32xbf16>
    tpu.vector_store %arg7[%c0_27, %c128], %19 {strides = array<i32>} : memref<64x288xbf16, #tpu.memory_space<vmem>>, vector<64x32xbf16>,
    %c1_28 = arith.constant 1 : index
    %c2_29 = arith.constant 2 : index
    %c0_30 = arith.constant 0 : index
    %21 = vector.load %arg6[%c1_28, %c2_29, %c0_30] : memref<10x10x32xbf16, #tpu.memory_space<vmem>>, vector<8x8x32xbf16>
    %22 = vector.shape_cast %21 : vector<8x8x32xbf16> to vector<64x32xbf16>
    %c0_31 = arith.constant 0 : index
    %c160 = arith.constant 160 : index
    %23 = vector.load %arg7[%c0_31, %c160] : memref<64x288xbf16, #tpu.memory_space<vmem>>, vector<64x32xbf16>
    tpu.vector_store %arg7[%c0_31, %c160], %22 {strides = array<i32>} : memref<64x288xbf16, #tpu.memory_space<vmem>>, vector<64x32xbf16>,
    %c2_32 = arith.constant 2 : index
    %c0_33 = arith.constant 0 : index
    %c0_34 = arith.constant 0 : index
    %24 = vector.load %arg6[%c2_32, %c0_33, %c0_34] : memref<10x10x32xbf16, #tpu.memory_space<vmem>>, vector<8x8x32xbf16>
    %25 = vector.shape_cast %24 : vector<8x8x32xbf16> to vector<64x32xbf16>
    %c0_35 = arith.constant 0 : index
    %c192 = arith.constant 192 : index
    %26 = vector.load %arg7[%c0_35, %c192] : memref<64x288xbf16, #tpu.memory_space<vmem>>, vector<64x32xbf16>
    tpu.vector_store %arg7[%c0_35, %c192], %25 {strides = array<i32>} : memref<64x288xbf16, #tpu.memory_space<vmem>>, vector<64x32xbf16>,
    %c2_36 = arith.constant 2 : index
    %c1_37 = arith.constant 1 : index
    %c0_38 = arith.constant 0 : index
    %27 = vector.load %arg6[%c2_36, %c1_37, %c0_38] : memref<10x10x32xbf16, #tpu.memory_space<vmem>>, vector<8x8x32xbf16>
    %28 = vector.shape_cast %27 : vector<8x8x32xbf16> to vector<64x32xbf16>
    %c0_39 = arith.constant 0 : index
    %c224 = arith.constant 224 : index
    %29 = vector.load %arg7[%c0_39, %c224] : memref<64x288xbf16, #tpu.memory_space<vmem>>, vector<64x32xbf16>
    tpu.vector_store %arg7[%c0_39, %c224], %28 {strides = array<i32>} : memref<64x288xbf16, #tpu.memory_space<vmem>>, vector<64x32xbf16>,
    %c2_40 = arith.constant 2 : index
    %c2_41 = arith.constant 2 : index
    %c0_42 = arith.constant 0 : index
    %30 = vector.load %arg6[%c2_40, %c2_41, %c0_42] : memref<10x10x32xbf16, #tpu.memory_space<vmem>>, vector<8x8x32xbf16>
    %31 = vector.shape_cast %30 : vector<8x8x32xbf16> to vector<64x32xbf16>
    %c0_43 = arith.constant 0 : index
    %c256 = arith.constant 256 : index
    %32 = vector.load %arg7[%c0_43, %c256] : memref<64x288xbf16, #tpu.memory_space<vmem>>, vector<64x32xbf16>
    tpu.vector_store %arg7[%c0_43, %c256], %31 {strides = array<i32>} : memref<64x288xbf16, #tpu.memory_space<vmem>>, vector<64x32xbf16>,
    %c0_44 = arith.constant 0 : index
    %c0_45 = arith.constant 0 : index
    %33 = vector.load %arg7[%c0_44, %c0_45] : memref<64x288xbf16, #tpu.memory_space<vmem>>, vector<64x288xbf16>
    %c0_46 = arith.constant 0 : index
    %c0_47 = arith.constant 0 : index
    %34 = vector.load %arg2[%c0_46, %c0_47] : memref<288x96xbf16, #tpu.memory_space<vmem>>, vector<288x96xbf16>
    %cst_48 = arith.constant dense<0.000000e+00> : vector<64x96xf32>
    %35 = tpu.matmul %33, %34, %cst_48 {dimension_numbers = #tpu.dot_dimension_numbers<[1], [0], [0], [1], [0, 0, 1, 1], [], []>} : vector<64x288xbf16>, vector<288x96xbf16>, vector<64x96xf32> -> vector<64x96xf32>
    %36 = vector.extract_strided_slice %35 {offsets = [0, 0], sizes = [64, 32], strides = [1, 1]} : vector<64x96xf32> to vector<64x32xf32>
    %37 = vector.extract_strided_slice %35 {offsets = [0, 32], sizes = [64, 32], strides = [1, 1]} : vector<64x96xf32> to vector<64x32xf32>
    %38 = vector.extract_strided_slice %35 {offsets = [0, 64], sizes = [64, 32], strides = [1, 1]} : vector<64x96xf32> to vector<64x32xf32>
    %39 = vector.extract_strided_slice %36 {offsets = [0, 0], sizes = [64, 8], strides = [1, 1]} : vector<64x32xf32> to vector<64x8xf32>
    %40 = arith.truncf %39 : vector<64x8xf32> to vector<64x8xbf16>
    %41 = vector.extract_strided_slice %37 {offsets = [0, 0], sizes = [64, 8], strides = [1, 1]} : vector<64x32xf32> to vector<64x8xf32>
    %42 = arith.truncf %41 : vector<64x8xf32> to vector<64x8xbf16>
    %43 = vector.extract_strided_slice %38 {offsets = [0, 0], sizes = [64, 8], strides = [1, 1]} : vector<64x32xf32> to vector<64x8xf32>
    %44 = arith.truncf %43 : vector<64x8xf32> to vector<64x8xbf16>
    %cst_49 = arith.constant dense<0.000000e+00> : vector<64x64xf32>
    %45 = tpu.matmul %40, %42, %cst_49 {dimension_numbers = #tpu.dot_dimension_numbers<[1], [1], [0], [0], [0, 0, 1, 0], [], []>} : vector<64x8xbf16>, vector<64x8xbf16>, vector<64x64xf32> -> vector<64x64xf32>
    %cst_50 = arith.constant dense<0xFF800000> : vector<64xf32>
    %46 = vector.multi_reduction <maximumf>, %45, %cst_50 [1] : vector<64x64xf32> to vector<64xf32>
    %47 = vector.shape_cast %46 : vector<64xf32> to vector<64x1xf32>
    %48 = vector.broadcast %47 : vector<64x1xf32> to vector<64x64xf32>
    %49 = arith.subf %45, %48 : vector<64x64xf32>
    %50 = math.exp %49 : vector<64x64xf32>
    %cst_51 = arith.constant dense<0.000000e+00> : vector<64xf32>
    %51 = vector.multi_reduction <add>, %50, %cst_51 [1] : vector<64x64xf32> to vector<64xf32>
    %52 = vector.shape_cast %51 : vector<64xf32> to vector<64x1xf32>
    %53 = arith.truncf %50 : vector<64x64xf32> to vector<64x64xbf16>
    %cst_52 = arith.constant dense<0.000000e+00> : vector<64x8xf32>
    %54 = tpu.matmul %53, %44, %cst_52 {dimension_numbers = #tpu.dot_dimension_numbers<[1], [0], [0], [1], [0, 0, 1, 1], [], []>} : vector<64x64xbf16>, vector<64x8xbf16>, vector<64x8xf32> -> vector<64x8xf32>
    %55 = tpu.reciprocal %52 {approx = true} : vector<64x1xf32> -> vector<64x1xf32>
    %56 = vector.broadcast %55 : vector<64x1xf32> to vector<64x8xf32>
    %57 = arith.mulf %54, %56 : vector<64x8xf32>
    %c0_53 = arith.constant 0 : index
    %c0_54 = arith.constant 0 : index
    %58 = vector.load %arg8[%c0_53, %c0_54] : memref<64x32xf32, #tpu.memory_space<vmem>>, vector<64x8xf32>
    tpu.vector_store %arg8[%c0_53, %c0_54], %57 {strides = array<i32>} : memref<64x32xf32, #tpu.memory_space<vmem>>, vector<64x8xf32>,
    %59 = vector.extract_strided_slice %36 {offsets = [0, 8], sizes = [64, 8], strides = [1, 1]} : vector<64x32xf32> to vector<64x8xf32>
    %60 = arith.truncf %59 : vector<64x8xf32> to vector<64x8xbf16>
    %61 = vector.extract_strided_slice %37 {offsets = [0, 8], sizes = [64, 8], strides = [1, 1]} : vector<64x32xf32> to vector<64x8xf32>
    %62 = arith.truncf %61 : vector<64x8xf32> to vector<64x8xbf16>
    %63 = vector.extract_strided_slice %38 {offsets = [0, 8], sizes = [64, 8], strides = [1, 1]} : vector<64x32xf32> to vector<64x8xf32>
    %64 = arith.truncf %63 : vector<64x8xf32> to vector<64x8xbf16>
    %cst_55 = arith.constant dense<0.000000e+00> : vector<64x64xf32>
    %65 = tpu.matmul %60, %62, %cst_55 {dimension_numbers = #tpu.dot_dimension_numbers<[1], [1], [0], [0], [0, 0, 1, 0], [], []>} : vector<64x8xbf16>, vector<64x8xbf16>, vector<64x64xf32> -> vector<64x64xf32>
    %cst_56 = arith.constant dense<0xFF800000> : vector<64xf32>
    %66 = vector.multi_reduction <maximumf>, %65, %cst_56 [1] : vector<64x64xf32> to vector<64xf32>
    %67 = vector.shape_cast %66 : vector<64xf32> to vector<64x1xf32>
    %68 = vector.broadcast %67 : vector<64x1xf32> to vector<64x64xf32>
    %69 = arith.subf %65, %68 : vector<64x64xf32>
    %70 = math.exp %69 : vector<64x64xf32>
    %cst_57 = arith.constant dense<0.000000e+00> : vector<64xf32>
    %71 = vector.multi_reduction <add>, %70, %cst_57 [1] : vector<64x64xf32> to vector<64xf32>
    %72 = vector.shape_cast %71 : vector<64xf32> to vector<64x1xf32>
    %73 = arith.truncf %70 : vector<64x64xf32> to vector<64x64xbf16>
    %cst_58 = arith.constant dense<0.000000e+00> : vector<64x8xf32>
    %74 = tpu.matmul %73, %64, %cst_58 {dimension_numbers = #tpu.dot_dimension_numbers<[1], [0], [0], [1], [0, 0, 1, 1], [], []>} : vector<64x64xbf16>, vector<64x8xbf16>, vector<64x8xf32> -> vector<64x8xf32>
    %75 = tpu.reciprocal %72 {approx = true} : vector<64x1xf32> -> vector<64x1xf32>
    %76 = vector.broadcast %75 : vector<64x1xf32> to vector<64x8xf32>
    %77 = arith.mulf %74, %76 : vector<64x8xf32>
    %c0_59 = arith.constant 0 : index
    %c8 = arith.constant 8 : index
    %78 = vector.load %arg8[%c0_59, %c8] : memref<64x32xf32, #tpu.memory_space<vmem>>, vector<64x8xf32>
    tpu.vector_store %arg8[%c0_59, %c8], %77 {strides = array<i32>} : memref<64x32xf32, #tpu.memory_space<vmem>>, vector<64x8xf32>,
    %79 = vector.extract_strided_slice %36 {offsets = [0, 16], sizes = [64, 8], strides = [1, 1]} : vector<64x32xf32> to vector<64x8xf32>
    %80 = arith.truncf %79 : vector<64x8xf32> to vector<64x8xbf16>
    %81 = vector.extract_strided_slice %37 {offsets = [0, 16], sizes = [64, 8], strides = [1, 1]} : vector<64x32xf32> to vector<64x8xf32>
    %82 = arith.truncf %81 : vector<64x8xf32> to vector<64x8xbf16>
    %83 = vector.extract_strided_slice %38 {offsets = [0, 16], sizes = [64, 8], strides = [1, 1]} : vector<64x32xf32> to vector<64x8xf32>
    %84 = arith.truncf %83 : vector<64x8xf32> to vector<64x8xbf16>
    %cst_60 = arith.constant dense<0.000000e+00> : vector<64x64xf32>
    %85 = tpu.matmul %80, %82, %cst_60 {dimension_numbers = #tpu.dot_dimension_numbers<[1], [1], [0], [0], [0, 0, 1, 0], [], []>} : vector<64x8xbf16>, vector<64x8xbf16>, vector<64x64xf32> -> vector<64x64xf32>
    %cst_61 = arith.constant dense<0xFF800000> : vector<64xf32>
    %86 = vector.multi_reduction <maximumf>, %85, %cst_61 [1] : vector<64x64xf32> to vector<64xf32>
    %87 = vector.shape_cast %86 : vector<64xf32> to vector<64x1xf32>
    %88 = vector.broadcast %87 : vector<64x1xf32> to vector<64x64xf32>
    %89 = arith.subf %85, %88 : vector<64x64xf32>
    %90 = math.exp %89 : vector<64x64xf32>
    %cst_62 = arith.constant dense<0.000000e+00> : vector<64xf32>
    %91 = vector.multi_reduction <add>, %90, %cst_62 [1] : vector<64x64xf32> to vector<64xf32>
    %92 = vector.shape_cast %91 : vector<64xf32> to vector<64x1xf32>
    %93 = arith.truncf %90 : vector<64x64xf32> to vector<64x64xbf16>
    %cst_63 = arith.constant dense<0.000000e+00> : vector<64x8xf32>
    %94 = tpu.matmul %93, %84, %cst_63 {dimension_numbers = #tpu.dot_dimension_numbers<[1], [0], [0], [1], [0, 0, 1, 1], [], []>} : vector<64x64xbf16>, vector<64x8xbf16>, vector<64x8xf32> -> vector<64x8xf32>
    %95 = tpu.reciprocal %92 {approx = true} : vector<64x1xf32> -> vector<64x1xf32>
    %96 = vector.broadcast %95 : vector<64x1xf32> to vector<64x8xf32>
    %97 = arith.mulf %94, %96 : vector<64x8xf32>
    %c0_64 = arith.constant 0 : index
    %c16 = arith.constant 16 : index
    %98 = vector.load %arg8[%c0_64, %c16] : memref<64x32xf32, #tpu.memory_space<vmem>>, vector<64x8xf32>
    tpu.vector_store %arg8[%c0_64, %c16], %97 {strides = array<i32>} : memref<64x32xf32, #tpu.memory_space<vmem>>, vector<64x8xf32>,
    %99 = vector.extract_strided_slice %36 {offsets = [0, 24], sizes = [64, 8], strides = [1, 1]} : vector<64x32xf32> to vector<64x8xf32>
    %100 = arith.truncf %99 : vector<64x8xf32> to vector<64x8xbf16>
    %101 = vector.extract_strided_slice %37 {offsets = [0, 24], sizes = [64, 8], strides = [1, 1]} : vector<64x32xf32> to vector<64x8xf32>
    %102 = arith.truncf %101 : vector<64x8xf32> to vector<64x8xbf16>
    %103 = vector.extract_strided_slice %38 {offsets = [0, 24], sizes = [64, 8], strides = [1, 1]} : vector<64x32xf32> to vector<64x8xf32>
    %104 = arith.truncf %103 : vector<64x8xf32> to vector<64x8xbf16>
    %cst_65 = arith.constant dense<0.000000e+00> : vector<64x64xf32>
    %105 = tpu.matmul %100, %102, %cst_65 {dimension_numbers = #tpu.dot_dimension_numbers<[1], [1], [0], [0], [0, 0, 1, 0], [], []>} : vector<64x8xbf16>, vector<64x8xbf16>, vector<64x64xf32> -> vector<64x64xf32>
    %cst_66 = arith.constant dense<0xFF800000> : vector<64xf32>
    %106 = vector.multi_reduction <maximumf>, %105, %cst_66 [1] : vector<64x64xf32> to vector<64xf32>
    %107 = vector.shape_cast %106 : vector<64xf32> to vector<64x1xf32>
    %108 = vector.broadcast %107 : vector<64x1xf32> to vector<64x64xf32>
    %109 = arith.subf %105, %108 : vector<64x64xf32>
    %110 = math.exp %109 : vector<64x64xf32>
    %cst_67 = arith.constant dense<0.000000e+00> : vector<64xf32>
    %111 = vector.multi_reduction <add>, %110, %cst_67 [1] : vector<64x64xf32> to vector<64xf32>
    %112 = vector.shape_cast %111 : vector<64xf32> to vector<64x1xf32>
    %113 = arith.truncf %110 : vector<64x64xf32> to vector<64x64xbf16>
    %cst_68 = arith.constant dense<0.000000e+00> : vector<64x8xf32>
    %114 = tpu.matmul %113, %104, %cst_68 {dimension_numbers = #tpu.dot_dimension_numbers<[1], [0], [0], [1], [0, 0, 1, 1], [], []>} : vector<64x64xbf16>, vector<64x8xbf16>, vector<64x8xf32> -> vector<64x8xf32>
    %115 = tpu.reciprocal %112 {approx = true} : vector<64x1xf32> -> vector<64x1xf32>
    %116 = vector.broadcast %115 : vector<64x1xf32> to vector<64x8xf32>
    %117 = arith.mulf %114, %116 : vector<64x8xf32>
    %c0_69 = arith.constant 0 : index
    %c24 = arith.constant 24 : index
    %118 = vector.load %arg8[%c0_69, %c24] : memref<64x32xf32, #tpu.memory_space<vmem>>, vector<64x8xf32>
    tpu.vector_store %arg8[%c0_69, %c24], %117 {strides = array<i32>} : memref<64x32xf32, #tpu.memory_space<vmem>>, vector<64x8xf32>,
    %c0_70 = arith.constant 0 : index
    %c0_71 = arith.constant 0 : index
    %119 = vector.load %arg8[%c0_70, %c0_71] : memref<64x32xf32, #tpu.memory_space<vmem>>, vector<64x32xf32>
    %120 = arith.truncf %119 : vector<64x32xf32> to vector<64x32xbf16>
    %c0_72 = arith.constant 0 : index
    %c0_73 = arith.constant 0 : index
    %121 = vector.load %arg3[%c0_72, %c0_73] : memref<32x32xbf16, #tpu.memory_space<vmem>>, vector<32x32xbf16>
    %cst_74 = arith.constant dense<0.000000e+00> : vector<64x32xf32>
    %122 = tpu.matmul %120, %121, %cst_74 {dimension_numbers = #tpu.dot_dimension_numbers<[1], [0], [0], [1], [0, 0, 1, 1], [], []>} : vector<64x32xbf16>, vector<32x32xbf16>, vector<64x32xf32> -> vector<64x32xf32>
    %c0_75 = arith.constant 0 : index
    %c0_76 = arith.constant 0 : index
    %123 = vector.load %arg4[%c0_75, %c0_76] : memref<1x32xf32, #tpu.memory_space<vmem>>, vector<1x32xf32>
    %124 = vector.broadcast %123 : vector<1x32xf32> to vector<64x32xf32>
    %125 = arith.addf %122, %124 : vector<64x32xf32>
    %c0_77 = arith.constant 0 : index
    %c0_78 = arith.constant 0 : index
    %c0_79 = arith.constant 0 : index
    %126 = vector.load %arg5[%c0_77, %c0_78, %c0_79] : memref<1x64x32xf32, #tpu.memory_space<vmem>>, vector<1x64x32xf32>
    %127 = vector.shape_cast %126 : vector<1x64x32xf32> to vector<64x32xf32>
    %128 = vector.shape_cast %125 : vector<64x32xf32> to vector<1x64x32xf32>
    tpu.vector_store %arg5[%c0_77, %c0_78, %c0_79], %128 {strides = array<i32>} : memref<1x64x32xf32, #tpu.memory_space<vmem>>, vector<1x64x32xf32>,
    return
  }
  func.func @transform_0(%arg0: i32) -> (i32, i32, i32, i32) {
    %c0_i32 = arith.constant 0 : i32
    %c0_i32_0 = arith.constant 0 : i32
    %c0_i32_1 = arith.constant 0 : i32
    %c0_i32_2 = arith.constant 0 : i32
    return %arg0, %c0_i32, %c0_i32_0, %c0_i32_1 : i32, i32, i32, i32
  }
  func.func @transform_1(%arg0: i32) -> (i32, i32) {
    %c0_i32 = arith.constant 0 : i32
    %c0_i32_0 = arith.constant 0 : i32
    %c0_i32_1 = arith.constant 0 : i32
    return %c0_i32, %c0_i32_0 : i32, i32
  }
  func.func @transform_2(%arg0: i32) -> (i32, i32) {
    %c0_i32 = arith.constant 0 : i32
    %c0_i32_0 = arith.constant 0 : i32
    %c0_i32_1 = arith.constant 0 : i32
    return %c0_i32, %c0_i32_0 : i32, i32
  }
  func.func @transform_3(%arg0: i32) -> (i32, i32) {
    %c0_i32 = arith.constant 0 : i32
    %c0_i32_0 = arith.constant 0 : i32
    %c0_i32_1 = arith.constant 0 : i32
    return %c0_i32, %c0_i32_0 : i32, i32
  }
  func.func @transform_4(%arg0: i32) -> (i32, i32, i32) {
    %c0_i32 = arith.constant 0 : i32
    %c0_i32_0 = arith.constant 0 : i32
    %c0_i32_1 = arith.constant 0 : i32
    return %arg0, %c0_i32, %c0_i32_0 : i32, i32, i32
  }
}

</mosaic_0001>

<llo_original>
// kernel: tpu_custom_call.1
$region0: #{tpu_custom_call.1}
  #allocation0 [shape = 'u32[]', space=smem, size = 0x4, offset = 0x4, fixed_abs, tag = 'smem constant byte address 0x4 - core index']
  #allocation1 [shape = 'u32[144,128]{1,0:T(1,128)}', space=vmem, size = 0x12000, scoped, tag = 'internal scratch']
  #allocation2 [shape = 'bf16[10,10,32]{2,1,0:T(8,128)(2,1)}', space=vmem, size = 0xa000, scoped, tag = 'scratch operand']
  #allocation3 [shape = 'bf16[64,288]{1,0:T(16,128)(2,1)}', space=vmem, size = 0xc000, scoped, tag = 'scratch operand']
  #allocation4 [shape = 'f32[64,32]{1,0:T(8,128)}', space=vmem, size = 0x8000, scoped, tag = 'scratch operand']
  %s0 = inlined_call_operand.hbm [shape: f32[2,8,8,32], index: 0, kind: input, shape index: {}]
  %s1 = inlined_call_operand.hbm [shape: bf16[288,96], index: 1, kind: input, shape index: {}]
  %s2 = inlined_call_operand.hbm [shape: bf16[32,32], index: 2, kind: input, shape index: {}]
  %s3 = inlined_call_operand.vmem [shape: f32[1,32], index: 3, kind: input, shape index: {}]
  %s4 = inlined_call_operand.vmem [shape: f32[2,64,32], index: 4, kind: output, shape index: {}]
  %s5 = sld [smem:[#allocation0]]
  $region61: #{tpu_custom_call.1} parent=0
    _
  %s7 = ssub.s32 1, %s5
  %s8 = scalar_select 0, %s7, %s5
  $region1: #{tpu_custom_call.1} parent=0
    #allocation5 [shape = 'u8[65536]{0}', space=vmem, size = 0x10000, scoped, tag = 'input window, operand 0']
    #allocation6 [shape = 's32[2]{0}', space=sflag, size = 0x8, scoped, tag = 'scoped memory for tpu_custom_call.1']
    #allocation7 [shape = 'u8[73728]{0}', space=vmem, size = 0x12000, scoped, tag = 'input window, operand 1, single buffered']
    #allocation8 [shape = 's32[1]{0}', space=sflag, size = 0x4, scoped, tag = 'scoped memory for tpu_custom_call.1']
    #allocation9 [shape = 'u8[8192]{0}', space=vmem, size = 0x2000, scoped, tag = 'input window, operand 2, single buffered']
    %9 = vsyncpa [#allocation6], 0
    %s10 = scalar_lea.sflag [#allocation6], 1
    %11 = vsyncpa %s10, 0
    %12 = vsyncpa [#allocation8], 0
    loop: start=0, step=1, limit=4
    $region2: #{tpu_custom_call.1} parent=1 // loop_pre_header
      _
    $region3: #{tpu_custom_call.1} parent=1 // loop_header
      %s14 = sphi 0, %s18
      %p15 = scmp.ge.s32.totalorder %s14, 4
      %s24 = sphi 0, %s26
      %s27 = sphi 0, %s24
      %s28 = sphi 0, %s27
      %s44 = sphi 0, %s28
      %s48 = sphi 0, %s48
      %s50 = sphi 0, %s48
      %s51 = sphi 0, %s50
      %s65 = sphi 0, %s51
      %s69 = sphi 0, %s69
      %s71 = sphi 0, %s69
      %s72 = sphi 0, %s71
      %s86 = sphi 0, %s72
      %s90 = sphi 0, %s90
      %s92 = sphi 0, %s90
      %s93 = sphi 0, %s92
      %s107 = sphi 0, %s93
      %s113 = sphi 0, %s115
      %s116 = sphi 0, %s113
      %s117 = sphi 0, %s116
      %s133 = sphi 0, %s117
    $region4: #{tpu_custom_call.1} parent=1 // loop_header_branch
      %17 = sbr.rel (%p15) target = $region8
    $region5: #{tpu_custom_call.1} parent=1 // loop_body
      %s19 = ssub.s32 %s14, 1
      %s20 = ssub.s32 %s14, 2
      %s21 = sadd.s32 %s14, 1
      %s22 = ssub.s32 %s14, %s21
      %p23 = scmp.eq.s32.totalorder %s22, 0
      %s25 = sadd.s32 %s24, 1
      %s26 = scalar_select %p23, %s24, %s25
      %p29 = pneg %p23
      %p30 = scmp.eq.s32.totalorder %s14, 1
      %p31 = por %p29, %p30
      %p32 = scmp.ne.s32.totalorder %s24, %s27
      %p33 = scmp.eq.s32.totalorder %s14, 0
      %p34 = por %p32, %p33
      %p35 = scmp.ne.s32.totalorder %s24, %s27
      %p36 = scmp.eq.s32.totalorder %s19, 1
      %p37 = por %p35, %p36
      %p38 = scmp.ne.s32.totalorder %s27, %s28
      %p39 = scmp.eq.s32.totalorder %s19, 0
      %p40 = por %p38, %p39
      %p41 = scmp.ne.s32.totalorder %s27, %s28
      %p42 = scmp.eq.s32.totalorder %s20, 1
      %p43 = por %p41, %p42
      %p45 = scmp.ne.s32.totalorder %s28, %s44
      %p46 = scmp.eq.s32.totalorder %s20, 0
      %p47 = por %p45, %p46
      %s49 = sadd.s32 %s48, 1
      %p52 = scmp.eq.s32.totalorder %s14, 1
      %p53 = scmp.ne.s32.totalorder %s48, %s50
      %p54 = scmp.eq.s32.totalorder %s14, 0
      %p55 = por %p53, %p54
      %p56 = scmp.ne.s32.totalorder %s48, %s50
      %p57 = scmp.eq.s32.totalorder %s19, 1
      %p58 = por %p56, %p57
      %p59 = scmp.ne.s32.totalorder %s50, %s51
      %p60 = scmp.eq.s32.totalorder %s19, 0
      %p61 = por %p59, %p60
      %p62 = scmp.ne.s32.totalorder %s50, %s51
      %p63 = scmp.eq.s32.totalorder %s20, 1
      %p64 = por %p62, %p63
      %p66 = scmp.ne.s32.totalorder %s51, %s65
      %p67 = scmp.eq.s32.totalorder %s20, 0
      %p68 = por %p66, %p67
      %s70 = sadd.s32 %s69, 1
      %p73 = scmp.eq.s32.totalorder %s14, 1
      %p74 = scmp.ne.s32.totalorder %s69, %s71
      %p75 = scmp.eq.s32.totalorder %s14, 0
      %p76 = por %p74, %p75
      %p77 = scmp.ne.s32.totalorder %s69, %s71
      %p78 = scmp.eq.s32.totalorder %s19, 1
      %p79 = por %p77, %p78
      %p80 = scmp.ne.s32.totalorder %s71, %s72
      %p81 = scmp.eq.s32.totalorder %s19, 0
      %p82 = por %p80, %p81
      %p83 = scmp.ne.s32.totalorder %s71, %s72
      %p84 = scmp.eq.s32.totalorder %s20, 1
      %p85 = por %p83, %p84
      %p87 = scmp.ne.s32.totalorder %s72, %s86
      %p88 = scmp.eq.s32.totalorder %s20, 0
      %p89 = por %p87, %p88
      %s91 = sadd.s32 %s90, 1
      %p94 = scmp.eq.s32.totalorder %s14, 1
      %p95 = scmp.ne.s32.totalorder %s90, %s92
      %p96 = scmp.eq.s32.totalorder %s14, 0
      %p97 = por %p95, %p96
      %p98 = scmp.ne.s32.totalorder %s90, %s92
      %p99 = scmp.eq.s32.totalorder %s19, 1
      %p100 = por %p98, %p99
      %p101 = scmp.ne.s32.totalorder %s92, %s93
      %p102 = scmp.eq.s32.totalorder %s19, 0
      %p103 = por %p101, %p102
      %p104 = scmp.ne.s32.totalorder %s92, %s93
      %p105 = scmp.eq.s32.totalorder %s20, 1
      %p106 = por %p104, %p105
      %p108 = scmp.ne.s32.totalorder %s93, %s107
      %p109 = scmp.eq.s32.totalorder %s20, 0
      %p110 = por %p108, %p109
      %s111 = ssub.s32 %s14, %s21
      %p112 = scmp.eq.s32.totalorder %s111, 0
      %s114 = sadd.s32 %s113, 1
      %s115 = scalar_select %p112, %s113, %s114
      %p118 = pneg %p112
      %p119 = scmp.eq.s32.totalorder %s14, 1
      %p120 = por %p118, %p119
      %p121 = scmp.ne.s32.totalorder %s113, %s116
      %p122 = scmp.eq.s32.totalorder %s14, 0
      %p123 = por %p121, %p122
      %p124 = scmp.ne.s32.totalorder %s113, %s116
      %p125 = scmp.eq.s32.totalorder %s19, 1
      %p126 = por %p124, %p125
      %p127 = scmp.ne.s32.totalorder %s116, %s117
      %p128 = scmp.eq.s32.totalorder %s19, 0
      %p129 = por %p127, %p128
      %p130 = scmp.ne.s32.totalorder %s116, %s117
      %p131 = scmp.eq.s32.totalorder %s20, 1
      %p132 = por %p130, %p131
      %p134 = scmp.ne.s32.totalorder %s117, %s133
      %p135 = scmp.eq.s32.totalorder %s20, 0
      %p136 = por %p134, %p135
      %p137 = scmp.le.s32.totalorder 1, %s14
      %p138 = scmp.lt.s32.totalorder %s14, 3
      %p139 = pnand %p137, %p138
      %p140 = pneg %p139
      // Predicated region
      $region9: #{tpu_custom_call.1} parent=5 // pred_check
        _
      $region10: #{tpu_custom_call.1} parent=5 // pred_check_branch
        %142 = sbr.rel (%p139) target = $region12
      $region11: #{tpu_custom_call.1} parent=5 // pred_region
        %s143 = ssub.s32 %s14, 1
        // Predicated region
        $region13: #{tpu_custom_call.1} parent=11 // pred_check
          %p144 = pneg %p61
        $region14: #{tpu_custom_call.1} parent=11 // pred_check_branch
          %146 = sbr.rel (%p144) target = $region16
        $region15: #{tpu_custom_call.1} parent=11 // pred_region
          %s148 = ssub.s32 2304, 2304
          %149 = vsyncadd [#allocation8], %s148
          %s150 = sshll.u32 [#allocation7], 4
          %s151 = int_to_ptr.vmem [resolvable:$true] %s150
          %156 = dma.hbm_to_vmem [thread:$0]  %s1, 2304, %s151, [#allocation8], 64, 64, 4
        $region16: #{tpu_custom_call.1} parent=11 // pred_fallthru
          _
        // Predicated region
        $region17: #{tpu_custom_call.1} parent=11 // pred_check
          %p157 = pneg %p82
        $region18: #{tpu_custom_call.1} parent=11 // pred_check_branch
          %159 = sbr.rel (%p157) target = $region20
        $region19: #{tpu_custom_call.1} parent=11 // pred_region
          %s161 = ssub.s32 256, 256
          %162 = vsyncadd [#allocation8], %s161
          %s163 = sshll.u32 [#allocation9], 4
          %s164 = int_to_ptr.vmem [resolvable:$true] %s163
          %169 = dma.hbm_to_vmem [thread:$0]  %s2, 256, %s164, [#allocation8], 64, 64, 4
        $region20: #{tpu_custom_call.1} parent=11 // pred_fallthru
          _
        // Predicated region
        $region21: #{tpu_custom_call.1} parent=11 // pred_check
          %p170 = pneg %p103
        $region22: #{tpu_custom_call.1} parent=11 // pred_check_branch
          %172 = sbr.rel (%p170) target = $region24
        $region23: #{tpu_custom_call.1} parent=11 // pred_region
          _
        $region24: #{tpu_custom_call.1} parent=11 // pred_fallthru
          _
      $region12: #{tpu_custom_call.1} parent=5 // pred_fallthru
        _
      %p173 = scmp.lt.s32.totalorder %s14, 2
      // Predicated region
      $region25: #{tpu_custom_call.1} parent=5 // pred_check
        %p174 = pneg %p173
      $region26: #{tpu_custom_call.1} parent=5 // pred_check_branch
        %176 = sbr.rel (%p174) target = $region28
      $region27: #{tpu_custom_call.1} parent=5 // pred_region
        // Predicated region
        $region29: #{tpu_custom_call.1} parent=27 // pred_check
          %p177 = pneg %p34
        $region30: #{tpu_custom_call.1} parent=27 // pred_check_branch
          %179 = sbr.rel (%p177) target = $region32
        $region31: #{tpu_custom_call.1} parent=27 // pred_region
          %s180 = sand.u32 %s24, 1
          %s181 = scalar_lea.sflag [#allocation6], %s180
          %s182 = sand.u32 %s24, 1
          %s183 = smul.addr %s182, 64
          %s184 = scalar_lea.vmem [#allocation5], %s183
          %s186 = ssub.s32 1024, 1024
          %187 = vsyncadd %s181, %s186
          %s188 = smul.addr %s14, 8
          %s189 = smul.addr %s188, 128
          %s190 = scalar_lea.hbm %s0, %s189
          %s191 = sshll.u32 %s184, 4
          %s192 = int_to_ptr.vmem [resolvable:$true] %s191
          %197 = dma.hbm_to_vmem [thread:$0]  %s190, 1024, %s192, %s181, 128, 128, 8
        $region32: #{tpu_custom_call.1} parent=27 // pred_fallthru
          _
      $region28: #{tpu_custom_call.1} parent=5 // pred_fallthru
        _
      %p198 = scmp.le.s32.totalorder 1, %s14
      %p199 = scmp.lt.s32.totalorder %s14, 3
      %p200 = pnand %p198, %p199
      %p201 = pneg %p200
      // Predicated region
      $region33: #{tpu_custom_call.1} parent=5 // pred_check
        _
      $region34: #{tpu_custom_call.1} parent=5 // pred_check_branch
        %203 = sbr.rel (%p200) target = $region36
      $region35: #{tpu_custom_call.1} parent=5 // pred_region
        %s204 = ssub.s32 %s14, 1
        %s205 = sand.u32 %s27, 1
        %s206 = scalar_lea.sflag [#allocation6], %s205
        %s207 = sand.u32 %s27, 1
        %s208 = smul.addr %s207, 64
        %s209 = scalar_lea.vmem [#allocation5], %s208
        // Predicated region
        $region37: #{tpu_custom_call.1} parent=35 // pred_check
          %p210 = pneg %p40
        $region38: #{tpu_custom_call.1} parent=35 // pred_check_branch
          %212 = sbr.rel (%p210) target = $region40
        $region39: #{tpu_custom_call.1} parent=35 // pred_region
          %213 = dma.done %s206, 1024
        $region40: #{tpu_custom_call.1} parent=35 // pred_fallthru
          _
        // Predicated region
        $region41: #{tpu_custom_call.1} parent=35 // pred_check
          %p214 = pneg %p61
        $region42: #{tpu_custom_call.1} parent=35 // pred_check_branch
          %216 = sbr.rel (%p214) target = $region44
        $region43: #{tpu_custom_call.1} parent=35 // pred_region
          %217 = dma.done [#allocation8], 2304
        $region44: #{tpu_custom_call.1} parent=35 // pred_fallthru
          _
        // Predicated region
        $region45: #{tpu_custom_call.1} parent=35 // pred_check
          %p218 = pneg %p82
        $region46: #{tpu_custom_call.1} parent=35 // pred_check_branch
          %220 = sbr.rel (%p218) target = $region48
        $region47: #{tpu_custom_call.1} parent=35 // pred_region
          %221 = dma.done [#allocation8], 256
        $region48: #{tpu_custom_call.1} parent=35 // pred_fallthru
          _
        %s222 = sand.u32 %s27, 1
        %s223 = scalar_lea.sflag [#allocation6], %s222
        %s224 = sand.u32 %s27, 1
        %s225 = smul.addr %s224, 64
        %s226 = scalar_lea.vmem [#allocation5], %s225
        %p227 = pneg %p40
        %p228 = pneg %p37
        %p229 = pneg %p61
        %p230 = pneg %p58
        %p231 = pneg %p82
        %p232 = pneg %p79
        %p233 = pneg %p103
        %p234 = pneg %p100
        %p235 = pneg %p129
        %p236 = pneg %p126
        %p237 = scmp.lt.s32.totalorder %s19, 1
        %s238 = scalar_select %p237, %s19, 1
        %s239 = smul.addr %s238, 8
        %s240 = smul.addr %s239, 8
        %s241 = scalar_lea.vmem %s4, %s240
        %p242 = scmp.lt.s32.totalorder %s19, 1
        %s243 = scalar_select %p242, %s19, 1
        %s244 = smul.addr %s243, 8
        %s245 = smul.addr %s244, 8
        %s246 = scalar_lea.vmem %s4, %s245
        %vm248 = vcmask 257024
        %249 = vst.msk [vmem:[#allocation2] sm:$0xf] %vm248, 0
        %vm250 = vcmask 253952
        %251 = vst.msk [vmem:[#allocation2 + $0x4] sm:$0x1] %vm250, 0
        %252 = vst.msk [vmem:[#allocation2 + $0x8] sm:$0xf] %vm248, 0
        %253 = vst.msk [vmem:[#allocation2 + $0xc] sm:$0x1] %vm250, 0
        %254 = vst.msk [vmem:[#allocation2 + $0x10] sm:$0xf] %vm248, 0
        %255 = vst.msk [vmem:[#allocation2 + $0x14] sm:$0x1] %vm250, 0
        %256 = vst.msk [vmem:[#allocation2 + $0x18] sm:$0xf] %vm248, 0
        %257 = vst.msk [vmem:[#allocation2 + $0x1c] sm:$0x1] %vm250, 0
        %258 = vst.msk [vmem:[#allocation2 + $0x20] sm:$0xf] %vm248, 0
        %259 = vst.msk [vmem:[#allocation2 + $0x24] sm:$0x1] %vm250, 0
        %260 = vst.msk [vmem:[#allocation2 + $0x28] sm:$0xf] %vm248, 0
        %261 = vst.msk [vmem:[#allocation2 + $0x2c] sm:$0x1] %vm250, 0
        %262 = vst.msk [vmem:[#allocation2 + $0x30] sm:$0xf] %vm248, 0
        %263 = vst.msk [vmem:[#allocation2 + $0x34] sm:$0x1] %vm250, 0
        %264 = vst.msk [vmem:[#allocation2 + $0x38] sm:$0xf] %vm248, 0
        %265 = vst.msk [vmem:[#allocation2 + $0x3c] sm:$0x1] %vm250, 0
        %266 = vst.msk [vmem:[#allocation2 + $0x40] sm:$0xf] %vm248, 0
        %267 = vst.msk [vmem:[#allocation2 + $0x44] sm:$0x1] %vm250, 0
        %268 = vst.msk [vmem:[#allocation2 + $0x48] sm:$0xf] %vm248, 0
        %269 = vst.msk [vmem:[#allocation2 + $0x4c] sm:$0x1] %vm250, 0
        %v270 = vld [vmem:[%s209] sm:$0xff]
        %v271 = vld [vmem:[%s209 + $0x8] sm:$0xff]
        %v272 = vld [vmem:[%s209 + $0x10] sm:$0xff]
        %v273 = vld [vmem:[%s209 + $0x18] sm:$0xff]
        %v274 = vld [vmem:[%s209 + $0x20] sm:$0xff]
        %v275 = vld [vmem:[%s209 + $0x28] sm:$0xff]
        %v276 = vld [vmem:[%s209 + $0x30] sm:$0xff]
        %v277 = vld [vmem:[%s209 + $0x38] sm:$0xff]
        %v278 = vpack.c.bf16 %v270, %v270
        %v279 = vpack.c.bf16 %v271, %v271
        %v280 = vpack.c.bf16 %v272, %v272
        %v281 = vpack.c.bf16 %v273, %v273
        %v282 = vpack.c.bf16 %v274, %v274
        %v283 = vpack.c.bf16 %v275, %v275
        %v284 = vpack.c.bf16 %v276, %v276
        %v285 = vpack.c.bf16 %v277, %v277
        %v294 = vunpack.c.l.b16 %v278
        %v295 = vunpack.c.l.b16 %v279
        %v296 = vunpack.c.l.b16 %v280
        %v297 = vunpack.c.l.b16 %v281
        %v298 = vunpack.c.l.b16 %v282
        %v299 = vunpack.c.l.b16 %v283
        %v300 = vunpack.c.l.b16 %v284
        %v301 = vunpack.c.l.b16 %v285
        %v302 = vpack.c.b16 %v294, %v294
        %v303 = vpack.c.b16 %v295, %v295
        %v304 = vpack.c.b16 %v296, %v296
        %v305 = vpack.c.b16 %v297, %v297
        %v306 = vpack.c.b16 %v298, %v298
        %v307 = vpack.c.b16 %v299, %v299
        %v308 = vpack.c.b16 %v300, %v300
        %v309 = vpack.c.b16 %v301, %v301
        %v311 = vshrl.u32 %v302, 16
        %v313 = vrot.slane %v311, 7
        %v314 = vshll.u32 %v302, 16
        %v316 = vor.u32 %v313, %v314
        %v317 = vrot.slane %v313, 4
        %v319 = vshrl.u32 %v303, 16
        %v321 = vrot.slane %v319, 7
        %v322 = vshll.u32 %v303, 16
        %v324 = vor.u32 %v321, %v322
        %v325 = vrot.slane %v321, 4
        %v327 = vshrl.u32 %v304, 16
        %v329 = vrot.slane %v327, 7
        %v330 = vshll.u32 %v304, 16
        %v332 = vor.u32 %v329, %v330
        %v333 = vrot.slane %v329, 4
        %v335 = vshrl.u32 %v305, 16
        %v337 = vrot.slane %v335, 7
        %v338 = vshll.u32 %v305, 16
        %v340 = vor.u32 %v337, %v338
        %v341 = vrot.slane %v337, 4
        %v343 = vshrl.u32 %v306, 16
        %v345 = vrot.slane %v343, 7
        %v346 = vshll.u32 %v306, 16
        %v348 = vor.u32 %v345, %v346
        %v349 = vrot.slane %v345, 4
        %v351 = vshrl.u32 %v307, 16
        %v353 = vrot.slane %v351, 7
        %v354 = vshll.u32 %v307, 16
        %v356 = vor.u32 %v353, %v354
        %v357 = vrot.slane %v353, 4
        %v359 = vshrl.u32 %v308, 16
        %v361 = vrot.slane %v359, 7
        %v362 = vshll.u32 %v308, 16
        %v364 = vor.u32 %v361, %v362
        %v365 = vrot.slane %v361, 4
        %v367 = vshrl.u32 %v309, 16
        %v369 = vrot.slane %v367, 7
        %v370 = vshll.u32 %v309, 16
        %v372 = vor.u32 %v369, %v370
        %v373 = vrot.slane %v369, 4
        %s390 = scalar_lea.vmem [#allocation2], 8
        %vm391 = vcmask 257024
        %vm392 = vsmask.f32 7938
        %vm393 = vmand %vm391, %vm392
        %v394 = vld [vmem:[%s390] sm:$0xf]
        %v395 = vsel %vm393, %v316, %v394
        %396 = vst [vmem:[%s390] sm:$0xf] %v395
        %vm397 = vcmask 253952
        %vm398 = vsmask.f32 256
        %vm399 = vmand %vm397, %vm398
        %v400 = vld [vmem:[%s390 + $0x4] sm:$0x1]
        %v401 = vsel %vm399, %v317, %v400
        %402 = vst [vmem:[%s390 + $0x4] sm:$0x1] %v401
        %v403 = vld [vmem:[%s390 + $0x8] sm:$0xf]
        %v404 = vsel %vm393, %v324, %v403
        %405 = vst [vmem:[%s390 + $0x8] sm:$0xf] %v404
        %v406 = vld [vmem:[%s390 + $0xc] sm:$0x1]
        %v407 = vsel %vm399, %v325, %v406
        %408 = vst [vmem:[%s390 + $0xc] sm:$0x1] %v407
        %v409 = vld [vmem:[%s390 + $0x10] sm:$0xf]
        %v410 = vsel %vm393, %v332, %v409
        %411 = vst [vmem:[%s390 + $0x10] sm:$0xf] %v410
        %v412 = vld [vmem:[%s390 + $0x14] sm:$0x1]
        %v413 = vsel %vm399, %v333, %v412
        %414 = vst [vmem:[%s390 + $0x14] sm:$0x1] %v413
        %v415 = vld [vmem:[%s390 + $0x18] sm:$0xf]
        %v416 = vsel %vm393, %v340, %v415
        %417 = vst [vmem:[%s390 + $0x18] sm:$0xf] %v416
        %v418 = vld [vmem:[%s390 + $0x1c] sm:$0x1]
        %v419 = vsel %vm399, %v341, %v418
        %420 = vst [vmem:[%s390 + $0x1c] sm:$0x1] %v419
        %v421 = vld [vmem:[%s390 + $0x20] sm:$0xf]
        %v422 = vsel %vm393, %v348, %v421
        %423 = vst [vmem:[%s390 + $0x20] sm:$0xf] %v422
        %v424 = vld [vmem:[%s390 + $0x24] sm:$0x1]
        %v425 = vsel %vm399, %v349, %v424
        %426 = vst [vmem:[%s390 + $0x24] sm:$0x1] %v425
        %v427 = vld [vmem:[%s390 + $0x28] sm:$0xf]
        %v428 = vsel %vm393, %v356, %v427
        %429 = vst [vmem:[%s390 + $0x28] sm:$0xf] %v428
        %v430 = vld [vmem:[%s390 + $0x2c] sm:$0x1]
        %v431 = vsel %vm399, %v357, %v430
        %432 = vst [vmem:[%s390 + $0x2c] sm:$0x1] %v431
        %v433 = vld [vmem:[%s390 + $0x30] sm:$0xf]
        %v434 = vsel %vm393, %v364, %v433
        %435 = vst [vmem:[%s390 + $0x30] sm:$0xf] %v434
        %v436 = vld [vmem:[%s390 + $0x34] sm:$0x1]
        %v437 = vsel %vm399, %v365, %v436
        %438 = vst [vmem:[%s390 + $0x34] sm:$0x1] %v437
        %v439 = vld [vmem:[%s390 + $0x38] sm:$0xf]
        %v440 = vsel %vm393, %v372, %v439
        %441 = vst [vmem:[%s390 + $0x38] sm:$0xf] %v440
        %v442 = vld [vmem:[%s390 + $0x3c] sm:$0x1]
        %v443 = vsel %vm399, %v373, %v442
        %444 = vst [vmem:[%s390 + $0x3c] sm:$0x1] %v443
        %v445 = vld [vmem:[#allocation2] sm:$0xf]
        %v446 = vld [vmem:[#allocation2 + $0x8] sm:$0xf]
        %v447 = vld [vmem:[#allocation2 + $0x10] sm:$0xf]
        %v448 = vld [vmem:[#allocation2 + $0x18] sm:$0xf]
        %v449 = vld [vmem:[#allocation2 + $0x20] sm:$0xf]
        %v450 = vld [vmem:[#allocation2 + $0x28] sm:$0xf]
        %v451 = vld [vmem:[#allocation2 + $0x30] sm:$0xf]
        %v452 = vld [vmem:[#allocation2 + $0x38] sm:$0xf]
        %v461 = vunpack.c.l.b16 %v445
        %v462 = vunpack.c.l.b16 %v446
        %v463 = vunpack.c.l.b16 %v447
        %v464 = vunpack.c.l.b16 %v448
        %v465 = vunpack.c.l.b16 %v449
        %v466 = vunpack.c.l.b16 %v450
        %v467 = vunpack.c.l.b16 %v451
        %v468 = vunpack.c.l.b16 %v452
        %v469 = vpack.c.b16 %v462, %v461
        %v470 = vpack.c.b16 %v464, %v463
        %v471 = vpack.c.b16 %v466, %v465
        %v472 = vpack.c.b16 %v468, %v467
        %vm477 = vcmask 261120
        %478 = vst.msk [vmem:[#allocation3] sm:$0xff] %vm477, %v469
        %479 = vst.msk [vmem:[#allocation3 + $0x18] sm:$0xff] %vm477, %v470
        %480 = vst.msk [vmem:[#allocation3 + $0x30] sm:$0xff] %vm477, %v471
        %481 = vst.msk [vmem:[#allocation3 + $0x48] sm:$0xff] %vm477, %v472
        %v482 = vld [vmem:[#allocation2] sm:$0xf]
        %v483 = vld [vmem:[#allocation2 + $0x4] sm:$0x1]
        %v484 = vld [vmem:[#allocation2 + $0x8] sm:$0xf]
        %v485 = vld [vmem:[#allocation2 + $0xc] sm:$0x1]
        %v486 = vld [vmem:[#allocation2 + $0x10] sm:$0xf]
        %v487 = vld [vmem:[#allocation2 + $0x14] sm:$0x1]
        %v488 = vld [vmem:[#allocation2 + $0x18] sm:$0xf]
        %v489 = vld [vmem:[#allocation2 + $0x1c] sm:$0x1]
        %v490 = vld [vmem:[#allocation2 + $0x20] sm:$0xf]
        %v491 = vld [vmem:[#allocation2 + $0x24] sm:$0x1]
        %v492 = vld [vmem:[#allocation2 + $0x28] sm:$0xf]
        %v493 = vld [vmem:[#allocation2 + $0x2c] sm:$0x1]
        %v494 = vld [vmem:[#allocation2 + $0x30] sm:$0xf]
        %v495 = vld [vmem:[#allocation2 + $0x34] sm:$0x1]
        %v496 = vld [vmem:[#allocation2 + $0x38] sm:$0xf]
        %v497 = vld [vmem:[#allocation2 + $0x3c] sm:$0x1]
        %vm498 = vsmask.f32 3328
        %vm499 = vsmask.f32 7440
        %vm500 = vmor %vm498, %vm499
        %v502 = vshrl.u32 %v482, 16
        %v504 = vrot.slane %v502, 4
        %v505 = vshll.u32 %v482, 16
        %v507 = vrot.slane %v505, 5
        %v508 = vor.u32 %v504, %v507
        %v509 = vrot.slane %v508, 4
        %v511 = vshll.u32 %v483, 16
        %v513 = vrot.slane %v511, 5
        %v514 = vsel %vm500, %v509, %v513
        %v516 = vshrl.u32 %v484, 16
        %v518 = vrot.slane %v516, 4
        %v519 = vshll.u32 %v484, 16
        %v521 = vrot.slane %v519, 5
        %v522 = vor.u32 %v518, %v521
        %v523 = vrot.slane %v522, 4
        %v525 = vshll.u32 %v485, 16
        %v527 = vrot.slane %v525, 5
        %v528 = vsel %vm500, %v523, %v527
        %v530 = vshrl.u32 %v486, 16
        %v532 = vrot.slane %v530, 4
        %v533 = vshll.u32 %v486, 16
        %v535 = vrot.slane %v533, 5
        %v536 = vor.u32 %v532, %v535
        %v537 = vrot.slane %v536, 4
        %v539 = vshll.u32 %v487, 16
        %v541 = vrot.slane %v539, 5
        %v542 = vsel %vm500, %v537, %v541
        %v544 = vshrl.u32 %v488, 16
        %v546 = vrot.slane %v544, 4
        %v547 = vshll.u32 %v488, 16
        %v549 = vrot.slane %v547, 5
        %v550 = vor.u32 %v546, %v549
        %v551 = vrot.slane %v550, 4
        %v553 = vshll.u32 %v489, 16
        %v555 = vrot.slane %v553, 5
        %v556 = vsel %vm500, %v551, %v555
        %v558 = vshrl.u32 %v490, 16
        %v560 = vrot.slane %v558, 4
        %v561 = vshll.u32 %v490, 16
        %v563 = vrot.slane %v561, 5
        %v564 = vor.u32 %v560, %v563
        %v565 = vrot.slane %v564, 4
        %v567 = vshll.u32 %v491, 16
        %v569 = vrot.slane %v567, 5
        %v570 = vsel %vm500, %v565, %v569
        %v572 = vshrl.u32 %v492, 16
        %v574 = vrot.slane %v572, 4
        %v575 = vshll.u32 %v492, 16
        %v577 = vrot.slane %v575, 5
        %v578 = vor.u32 %v574, %v577
        %v579 = vrot.slane %v578, 4
        %v581 = vshll.u32 %v493, 16
        %v583 = vrot.slane %v581, 5
        %v584 = vsel %vm500, %v579, %v583
        %v586 = vshrl.u32 %v494, 16
        %v588 = vrot.slane %v586, 4
        %v589 = vshll.u32 %v494, 16
        %v591 = vrot.slane %v589, 5
        %v592 = vor.u32 %v588, %v591
        %v593 = vrot.slane %v592, 4
        %v595 = vshll.u32 %v495, 16
        %v597 = vrot.slane %v595, 5
        %v598 = vsel %vm500, %v593, %v597
        %v600 = vshrl.u32 %v496, 16
        %v602 = vrot.slane %v600, 4
        %v603 = vshll.u32 %v496, 16
        %v605 = vrot.slane %v603, 5
        %v606 = vor.u32 %v602, %v605
        %v607 = vrot.slane %v606, 4
        %v609 = vshll.u32 %v497, 16
        %v611 = vrot.slane %v609, 5
        %v612 = vsel %vm500, %v607, %v611
        %v613 = vunpack.c.l.b16 %v514
        %v614 = vunpack.c.l.b16 %v528
        %v615 = vunpack.c.l.b16 %v542
        %v616 = vunpack.c.l.b16 %v556
        %v617 = vunpack.c.l.b16 %v570
        %v618 = vunpack.c.l.b16 %v584
        %v619 = vunpack.c.l.b16 %v598
        %v620 = vunpack.c.l.b16 %v612
        %v621 = vpack.c.b16 %v614, %v613
        %v622 = vpack.c.b16 %v616, %v615
        %v623 = vpack.c.b16 %v618, %v617
        %v624 = vpack.c.b16 %v620, %v619
        %625 = vrot.lane.b32.xlu0 %v621, 32
        %v626 = vpop.permute.xlu0 %625
        %627 = vrot.lane.b32.xlu0 %v622, 32
        %v628 = vpop.permute.xlu0 %627
        %629 = vrot.lane.b32.xlu0 %v623, 32
        %v630 = vpop.permute.xlu0 %629
        %631 = vrot.lane.b32.xlu0 %v624, 32
        %v632 = vpop.permute.xlu0 %631
        %vm637 = vcmask 523520
        %638 = vst.msk [vmem:[#allocation3] sm:$0xff] %vm637, %v626
        %639 = vst.msk [vmem:[#allocation3 + $0x18] sm:$0xff] %vm637, %v628
        %640 = vst.msk [vmem:[#allocation3 + $0x30] sm:$0xff] %vm637, %v630
        %641 = vst.msk [vmem:[#allocation3 + $0x48] sm:$0xff] %vm637, %v632
        %v642 = vld [vmem:[#allocation2] sm:$0xe]
        %v643 = vld [vmem:[#allocation2 + $0x4] sm:$0x1]
        %v644 = vld [vmem:[#allocation2 + $0x8] sm:$0xe]
        %v645 = vld [vmem:[#allocation2 + $0xc] sm:$0x1]
        %v646 = vld [vmem:[#allocation2 + $0x10] sm:$0xe]
        %v647 = vld [vmem:[#allocation2 + $0x14] sm:$0x1]
        %v648 = vld [vmem:[#allocation2 + $0x18] sm:$0xe]
        %v649 = vld [vmem:[#allocation2 + $0x1c] sm:$0x1]
        %v650 = vld [vmem:[#allocation2 + $0x20] sm:$0xe]
        %v651 = vld [vmem:[#allocation2 + $0x24] sm:$0x1]
        %v652 = vld [vmem:[#allocation2 + $0x28] sm:$0xe]
        %v653 = vld [vmem:[#allocation2 + $0x2c] sm:$0x1]
        %v654 = vld [vmem:[#allocation2 + $0x30] sm:$0xe]
        %v655 = vld [vmem:[#allocation2 + $0x34] sm:$0x1]
        %v656 = vld [vmem:[#allocation2 + $0x38] sm:$0xe]
        %v657 = vld [vmem:[#allocation2 + $0x3c] sm:$0x1]
        %vm674 = vcmask 1042432
        %vm675 = vcmask 1046532
        %vm676 = vmor %vm674, %vm675
        %v677 = vrot.slane %v642, 5
        %v678 = vrot.slane %v677, 4
        %v679 = vrot.slane %v643, 5
        %v680 = vsel %vm676, %v678, %v679
        %v681 = vrot.slane %v644, 5
        %v682 = vrot.slane %v681, 4
        %v683 = vrot.slane %v645, 5
        %v684 = vsel %vm676, %v682, %v683
        %v685 = vrot.slane %v646, 5
        %v686 = vrot.slane %v685, 4
        %v687 = vrot.slane %v647, 5
        %v688 = vsel %vm676, %v686, %v687
        %v689 = vrot.slane %v648, 5
        %v690 = vrot.slane %v689, 4
        %v691 = vrot.slane %v649, 5
        %v692 = vsel %vm676, %v690, %v691
        %v693 = vrot.slane %v650, 5
        %v694 = vrot.slane %v693, 4
        %v695 = vrot.slane %v651, 5
        %v696 = vsel %vm676, %v694, %v695
        %v697 = vrot.slane %v652, 5
        %v698 = vrot.slane %v697, 4
        %v699 = vrot.slane %v653, 5
        %v700 = vsel %vm676, %v698, %v699
        %v701 = vrot.slane %v654, 5
        %v702 = vrot.slane %v701, 4
        %v703 = vrot.slane %v655, 5
        %v704 = vsel %vm676, %v702, %v703
        %v705 = vrot.slane %v656, 5
        %v706 = vrot.slane %v705, 4
        %v707 = vrot.slane %v657, 5
        %v708 = vsel %vm676, %v706, %v707
        %v709 = vunpack.c.l.b16 %v680
        %v710 = vunpack.c.l.b16 %v684
        %v711 = vunpack.c.l.b16 %v688
        %v712 = vunpack.c.l.b16 %v692
        %v713 = vunpack.c.l.b16 %v696
        %v714 = vunpack.c.l.b16 %v700
        %v715 = vunpack.c.l.b16 %v704
        %v716 = vunpack.c.l.b16 %v708
        %v717 = vpack.c.b16 %v710, %v709
        %v718 = vpack.c.b16 %v712, %v711
        %v719 = vpack.c.b16 %v714, %v713
        %v720 = vpack.c.b16 %v716, %v715
        %721 = vrot.lane.b32.xlu0 %v717, 64
        %v722 = vpop.permute.xlu0 %721
        %723 = vrot.lane.b32.xlu0 %v718, 64
        %v724 = vpop.permute.xlu0 %723
        %725 = vrot.lane.b32.xlu0 %v719, 64
        %v726 = vpop.permute.xlu0 %725
        %727 = vrot.lane.b32.xlu0 %v720, 64
        %v728 = vpop.permute.xlu0 %727
        %vm733 = vcmask 785920
        %734 = vst.msk [vmem:[#allocation3] sm:$0xff] %vm733, %v722
        %735 = vst.msk [vmem:[#allocation3 + $0x18] sm:$0xff] %vm733, %v724
        %736 = vst.msk [vmem:[#allocation3 + $0x30] sm:$0xff] %vm733, %v726
        %737 = vst.msk [vmem:[#allocation3 + $0x48] sm:$0xff] %vm733, %v728
        %v738 = vld [vmem:[%s390] sm:$0xf]
        %v739 = vld [vmem:[%s390 + $0x8] sm:$0xf]
        %v740 = vld [vmem:[%s390 + $0x10] sm:$0xf]
        %v741 = vld [vmem:[%s390 + $0x18] sm:$0xf]
        %v742 = vld [vmem:[%s390 + $0x20] sm:$0xf]
        %v743 = vld [vmem:[%s390 + $0x28] sm:$0xf]
        %v744 = vld [vmem:[%s390 + $0x30] sm:$0xf]
        %v745 = vld [vmem:[%s390 + $0x38] sm:$0xf]
        %v754 = vunpack.c.l.b16 %v738
        %v755 = vunpack.c.l.b16 %v739
        %v756 = vunpack.c.l.b16 %v740
        %v757 = vunpack.c.l.b16 %v741
        %v758 = vunpack.c.l.b16 %v742
        %v759 = vunpack.c.l.b16 %v743
        %v760 = vunpack.c.l.b16 %v744
        %v761 = vunpack.c.l.b16 %v745
        %v762 = vpack.c.b16 %v755, %v754
        %v763 = vpack.c.b16 %v757, %v756
        %v764 = vpack.c.b16 %v759, %v758
        %v765 = vpack.c.b16 %v761, %v760
        %766 = vrot.lane.b32.xlu0 %v762, 96
        %v767 = vpop.permute.xlu0 %766
        %768 = vrot.lane.b32.xlu0 %v763, 96
        %v769 = vpop.permute.xlu0 %768
        %770 = vrot.lane.b32.xlu0 %v764, 96
        %v771 = vpop.permute.xlu0 %770
        %772 = vrot.lane.b32.xlu0 %v765, 96
        %v773 = vpop.permute.xlu0 %772
        %vm778 = vcmask 1048320
        %779 = vst.msk [vmem:[#allocation3] sm:$0xff] %vm778, %v767
        %780 = vst.msk [vmem:[#allocation3 + $0x18] sm:$0xff] %vm778, %v769
        %781 = vst.msk [vmem:[#allocation3 + $0x30] sm:$0xff] %vm778, %v771
        %782 = vst.msk [vmem:[#allocation3 + $0x48] sm:$0xff] %vm778, %v773
        %v783 = vld [vmem:[%s390] sm:$0xf]
        %v784 = vld [vmem:[%s390 + $0x4] sm:$0x1]
        %v785 = vld [vmem:[%s390 + $0x8] sm:$0xf]
        %v786 = vld [vmem:[%s390 + $0xc] sm:$0x1]
        %v787 = vld [vmem:[%s390 + $0x10] sm:$0xf]
        %v788 = vld [vmem:[%s390 + $0x14] sm:$0x1]
        %v789 = vld [vmem:[%s390 + $0x18] sm:$0xf]
        %v790 = vld [vmem:[%s390 + $0x1c] sm:$0x1]
        %v791 = vld [vmem:[%s390 + $0x20] sm:$0xf]
        %v792 = vld [vmem:[%s390 + $0x24] sm:$0x1]
        %v793 = vld [vmem:[%s390 + $0x28] sm:$0xf]
        %v794 = vld [vmem:[%s390 + $0x2c] sm:$0x1]
        %v795 = vld [vmem:[%s390 + $0x30] sm:$0xf]
        %v796 = vld [vmem:[%s390 + $0x34] sm:$0x1]
        %v797 = vld [vmem:[%s390 + $0x38] sm:$0xf]
        %v798 = vld [vmem:[%s390 + $0x3c] sm:$0x1]
        %v800 = vshrl.u32 %v783, 16
        %v802 = vrot.slane %v800, 4
        %v803 = vshll.u32 %v783, 16
        %v805 = vrot.slane %v803, 5
        %v806 = vor.u32 %v802, %v805
        %v807 = vrot.slane %v806, 4
        %v809 = vshll.u32 %v784, 16
        %v811 = vrot.slane %v809, 5
        %v812 = vsel %vm500, %v807, %v811
        %v814 = vshrl.u32 %v785, 16
        %v816 = vrot.slane %v814, 4
        %v817 = vshll.u32 %v785, 16
        %v819 = vrot.slane %v817, 5
        %v820 = vor.u32 %v816, %v819
        %v821 = vrot.slane %v820, 4
        %v823 = vshll.u32 %v786, 16
        %v825 = vrot.slane %v823, 5
        %v826 = vsel %vm500, %v821, %v825
        %v828 = vshrl.u32 %v787, 16
        %v830 = vrot.slane %v828, 4
        %v831 = vshll.u32 %v787, 16
        %v833 = vrot.slane %v831, 5
        %v834 = vor.u32 %v830, %v833
        %v835 = vrot.slane %v834, 4
        %v837 = vshll.u32 %v788, 16
        %v839 = vrot.slane %v837, 5
        %v840 = vsel %vm500, %v835, %v839
        %v842 = vshrl.u32 %v789, 16
        %v844 = vrot.slane %v842, 4
        %v845 = vshll.u32 %v789, 16
        %v847 = vrot.slane %v845, 5
        %v848 = vor.u32 %v844, %v847
        %v849 = vrot.slane %v848, 4
        %v851 = vshll.u32 %v790, 16
        %v853 = vrot.slane %v851, 5
        %v854 = vsel %vm500, %v849, %v853
        %v856 = vshrl.u32 %v791, 16
        %v858 = vrot.slane %v856, 4
        %v859 = vshll.u32 %v791, 16
        %v861 = vrot.slane %v859, 5
        %v862 = vor.u32 %v858, %v861
        %v863 = vrot.slane %v862, 4
        %v865 = vshll.u32 %v792, 16
        %v867 = vrot.slane %v865, 5
        %v868 = vsel %vm500, %v863, %v867
        %v870 = vshrl.u32 %v793, 16
        %v872 = vrot.slane %v870, 4
        %v873 = vshll.u32 %v793, 16
        %v875 = vrot.slane %v873, 5
        %v876 = vor.u32 %v872, %v875
        %v877 = vrot.slane %v876, 4
        %v879 = vshll.u32 %v794, 16
        %v881 = vrot.slane %v879, 5
        %v882 = vsel %vm500, %v877, %v881
        %v884 = vshrl.u32 %v795, 16
        %v886 = vrot.slane %v884, 4
        %v887 = vshll.u32 %v795, 16
        %v889 = vrot.slane %v887, 5
        %v890 = vor.u32 %v886, %v889
        %v891 = vrot.slane %v890, 4
        %v893 = vshll.u32 %v796, 16
        %v895 = vrot.slane %v893, 5
        %v896 = vsel %vm500, %v891, %v895
        %v898 = vshrl.u32 %v797, 16
        %v900 = vrot.slane %v898, 4
        %v901 = vshll.u32 %v797, 16
        %v903 = vrot.slane %v901, 5
        %v904 = vor.u32 %v900, %v903
        %v905 = vrot.slane %v904, 4
        %v907 = vshll.u32 %v798, 16
        %v909 = vrot.slane %v907, 5
        %v910 = vsel %vm500, %v905, %v909
        %v911 = vunpack.c.l.b16 %v812
        %v912 = vunpack.c.l.b16 %v826
        %v913 = vunpack.c.l.b16 %v840
        %v914 = vunpack.c.l.b16 %v854
        %v915 = vunpack.c.l.b16 %v868
        %v916 = vunpack.c.l.b16 %v882
        %v917 = vunpack.c.l.b16 %v896
        %v918 = vunpack.c.l.b16 %v910
        %v919 = vpack.c.b16 %v912, %v911
        %v920 = vpack.c.b16 %v914, %v913
        %v921 = vpack.c.b16 %v916, %v915
        %v922 = vpack.c.b16 %v918, %v917
        %927 = vst.msk [vmem:[#allocation3 + $0x8] sm:$0xff] %vm477, %v919
        %928 = vst.msk [vmem:[#allocation3 + $0x20] sm:$0xff] %vm477, %v920
        %929 = vst.msk [vmem:[#allocation3 + $0x38] sm:$0xff] %vm477, %v921
        %930 = vst.msk [vmem:[#allocation3 + $0x50] sm:$0xff] %vm477, %v922
        %v931 = vld [vmem:[%s390] sm:$0xe]
        %v932 = vld [vmem:[%s390 + $0x4] sm:$0x1]
        %v933 = vld [vmem:[%s390 + $0x8] sm:$0xe]
        %v934 = vld [vmem:[%s390 + $0xc] sm:$0x1]
        %v935 = vld [vmem:[%s390 + $0x10] sm:$0xe]
        %v936 = vld [vmem:[%s390 + $0x14] sm:$0x1]
        %v937 = vld [vmem:[%s390 + $0x18] sm:$0xe]
        %v938 = vld [vmem:[%s390 + $0x1c] sm:$0x1]
        %v939 = vld [vmem:[%s390 + $0x20] sm:$0xe]
        %v940 = vld [vmem:[%s390 + $0x24] sm:$0x1]
        %v941 = vld [vmem:[%s390 + $0x28] sm:$0xe]
        %v942 = vld [vmem:[%s390 + $0x2c] sm:$0x1]
        %v943 = vld [vmem:[%s390 + $0x30] sm:$0xe]
        %v944 = vld [vmem:[%s390 + $0x34] sm:$0x1]
        %v945 = vld [vmem:[%s390 + $0x38] sm:$0xe]
        %v946 = vld [vmem:[%s390 + $0x3c] sm:$0x1]
        %v963 = vrot.slane %v931, 5
        %v964 = vrot.slane %v963, 4
        %v965 = vrot.slane %v932, 5
        %v966 = vsel %vm676, %v964, %v965
        %v967 = vrot.slane %v933, 5
        %v968 = vrot.slane %v967, 4
        %v969 = vrot.slane %v934, 5
        %v970 = vsel %vm676, %v968, %v969
        %v971 = vrot.slane %v935, 5
        %v972 = vrot.slane %v971, 4
        %v973 = vrot.slane %v936, 5
        %v974 = vsel %vm676, %v972, %v973
        %v975 = vrot.slane %v937, 5
        %v976 = vrot.slane %v975, 4
        %v977 = vrot.slane %v938, 5
        %v978 = vsel %vm676, %v976, %v977
        %v979 = vrot.slane %v939, 5
        %v980 = vrot.slane %v979, 4
        %v981 = vrot.slane %v940, 5
        %v982 = vsel %vm676, %v980, %v981
        %v983 = vrot.slane %v941, 5
        %v984 = vrot.slane %v983, 4
        %v985 = vrot.slane %v942, 5
        %v986 = vsel %vm676, %v984, %v985
        %v987 = vrot.slane %v943, 5
        %v988 = vrot.slane %v987, 4
        %v989 = vrot.slane %v944, 5
        %v990 = vsel %vm676, %v988, %v989
        %v991 = vrot.slane %v945, 5
        %v992 = vrot.slane %v991, 4
        %v993 = vrot.slane %v946, 5
        %v994 = vsel %vm676, %v992, %v993
        %v995 = vunpack.c.l.b16 %v966
        %v996 = vunpack.c.l.b16 %v970
        %v997 = vunpack.c.l.b16 %v974
        %v998 = vunpack.c.l.b16 %v978
        %v999 = vunpack.c.l.b16 %v982
        %v1000 = vunpack.c.l.b16 %v986
        %v1001 = vunpack.c.l.b16 %v990
        %v1002 = vunpack.c.l.b16 %v994
        %v1003 = vpack.c.b16 %v996, %v995
        %v1004 = vpack.c.b16 %v998, %v997
        %v1005 = vpack.c.b16 %v1000, %v999
        %v1006 = vpack.c.b16 %v1002, %v1001
        %1007 = vrot.lane.b32.xlu0 %v1003, 32
        %v1008 = vpop.permute.xlu0 %1007
        %1009 = vrot.lane.b32.xlu0 %v1004, 32
        %v1010 = vpop.permute.xlu0 %1009
        %1011 = vrot.lane.b32.xlu0 %v1005, 32
        %v1012 = vpop.permute.xlu0 %1011
        %1013 = vrot.lane.b32.xlu0 %v1006, 32
        %v1014 = vpop.permute.xlu0 %1013
        %1019 = vst.msk [vmem:[#allocation3 + $0x8] sm:$0xff] %vm637, %v1008
        %1020 = vst.msk [vmem:[#allocation3 + $0x20] sm:$0xff] %vm637, %v1010
        %1021 = vst.msk [vmem:[#allocation3 + $0x38] sm:$0xff] %vm637, %v1012
        %1022 = vst.msk [vmem:[#allocation3 + $0x50] sm:$0xff] %vm637, %v1014
        %s1023 = scalar_lea.vmem [#allocation2], 16
        %v1024 = vld [vmem:[%s1023] sm:$0xf]
        %v1025 = vld [vmem:[%s1023 + $0x8] sm:$0xf]
        %v1026 = vld [vmem:[%s1023 + $0x10] sm:$0xf]
        %v1027 = vld [vmem:[%s1023 + $0x18] sm:$0xf]
        %v1028 = vld [vmem:[%s1023 + $0x20] sm:$0xf]
        %v1029 = vld [vmem:[%s1023 + $0x28] sm:$0xf]
        %v1030 = vld [vmem:[%s1023 + $0x30] sm:$0xf]
        %v1031 = vld [vmem:[%s1023 + $0x38] sm:$0xf]
        %v1040 = vunpack.c.l.b16 %v1024
        %v1041 = vunpack.c.l.b16 %v1025
        %v1042 = vunpack.c.l.b16 %v1026
        %v1043 = vunpack.c.l.b16 %v1027
        %v1044 = vunpack.c.l.b16 %v1028
        %v1045 = vunpack.c.l.b16 %v1029
        %v1046 = vunpack.c.l.b16 %v1030
        %v1047 = vunpack.c.l.b16 %v1031
        %v1048 = vpack.c.b16 %v1041, %v1040
        %v1049 = vpack.c.b16 %v1043, %v1042
        %v1050 = vpack.c.b16 %v1045, %v1044
        %v1051 = vpack.c.b16 %v1047, %v1046
        %1052 = vrot.lane.b32.xlu0 %v1048, 64
        %v1053 = vpop.permute.xlu0 %1052
        %1054 = vrot.lane.b32.xlu0 %v1049, 64
        %v1055 = vpop.permute.xlu0 %1054
        %1056 = vrot.lane.b32.xlu0 %v1050, 64
        %v1057 = vpop.permute.xlu0 %1056
        %1058 = vrot.lane.b32.xlu0 %v1051, 64
        %v1059 = vpop.permute.xlu0 %1058
        %1064 = vst.msk [vmem:[#allocation3 + $0x8] sm:$0xff] %vm733, %v1053
        %1065 = vst.msk [vmem:[#allocation3 + $0x20] sm:$0xff] %vm733, %v1055
        %1066 = vst.msk [vmem:[#allocation3 + $0x38] sm:$0xff] %vm733, %v1057
        %1067 = vst.msk [vmem:[#allocation3 + $0x50] sm:$0xff] %vm733, %v1059
        %v1068 = vld [vmem:[%s1023] sm:$0xf]
        %v1069 = vld [vmem:[%s1023 + $0x4] sm:$0x1]
        %v1070 = vld [vmem:[%s1023 + $0x8] sm:$0xf]
        %v1071 = vld [vmem:[%s1023 + $0xc] sm:$0x1]
        %v1072 = vld [vmem:[%s1023 + $0x10] sm:$0xf]
        %v1073 = vld [vmem:[%s1023 + $0x14] sm:$0x1]
        %v1074 = vld [vmem:[%s1023 + $0x18] sm:$0xf]
        %v1075 = vld [vmem:[%s1023 + $0x1c] sm:$0x1]
        %v1076 = vld [vmem:[%s1023 + $0x20] sm:$0xf]
        %v1077 = vld [vmem:[%s1023 + $0x24] sm:$0x1]
        %v1078 = vld [vmem:[%s1023 + $0x28] sm:$0xf]
        %v1079 = vld [vmem:[%s1023 + $0x2c] sm:$0x1]
        %v1080 = vld [vmem:[%s1023 + $0x30] sm:$0xf]
        %v1081 = vld [vmem:[%s1023 + $0x34] sm:$0x1]
        %v1082 = vld [vmem:[%s1023 + $0x38] sm:$0xf]
        %v1083 = vld [vmem:[%s1023 + $0x3c] sm:$0x1]
        %v1085 = vshrl.u32 %v1068, 16
        %v1087 = vrot.slane %v1085, 4
        %v1088 = vshll.u32 %v1068, 16
        %v1090 = vrot.slane %v1088, 5
        %v1091 = vor.u32 %v1087, %v1090
        %v1092 = vrot.slane %v1091, 4
        %v1094 = vshll.u32 %v1069, 16
        %v1096 = vrot.slane %v1094, 5
        %v1097 = vsel %vm500, %v1092, %v1096
        %v1099 = vshrl.u32 %v1070, 16
        %v1101 = vrot.slane %v1099, 4
        %v1102 = vshll.u32 %v1070, 16
        %v1104 = vrot.slane %v1102, 5
        %v1105 = vor.u32 %v1101, %v1104
        %v1106 = vrot.slane %v1105, 4
        %v1108 = vshll.u32 %v1071, 16
        %v1110 = vrot.slane %v1108, 5
        %v1111 = vsel %vm500, %v1106, %v1110
        %v1113 = vshrl.u32 %v1072, 16
        %v1115 = vrot.slane %v1113, 4
        %v1116 = vshll.u32 %v1072, 16
        %v1118 = vrot.slane %v1116, 5
        %v1119 = vor.u32 %v1115, %v1118
        %v1120 = vrot.slane %v1119, 4
        %v1122 = vshll.u32 %v1073, 16
        %v1124 = vrot.slane %v1122, 5
        %v1125 = vsel %vm500, %v1120, %v1124
        %v1127 = vshrl.u32 %v1074, 16
        %v1129 = vrot.slane %v1127, 4
        %v1130 = vshll.u32 %v1074, 16
        %v1132 = vrot.slane %v1130, 5
        %v1133 = vor.u32 %v1129, %v1132
        %v1134 = vrot.slane %v1133, 4
        %v1136 = vshll.u32 %v1075, 16
        %v1138 = vrot.slane %v1136, 5
        %v1139 = vsel %vm500, %v1134, %v1138
        %v1141 = vshrl.u32 %v1076, 16
        %v1143 = vrot.slane %v1141, 4
        %v1144 = vshll.u32 %v1076, 16
        %v1146 = vrot.slane %v1144, 5
        %v1147 = vor.u32 %v1143, %v1146
        %v1148 = vrot.slane %v1147, 4
        %v1150 = vshll.u32 %v1077, 16
        %v1152 = vrot.slane %v1150, 5
        %v1153 = vsel %vm500, %v1148, %v1152
        %v1155 = vshrl.u32 %v1078, 16
        %v1157 = vrot.slane %v1155, 4
        %v1158 = vshll.u32 %v1078, 16
        %v1160 = vrot.slane %v1158, 5
        %v1161 = vor.u32 %v1157, %v1160
        %v1162 = vrot.slane %v1161, 4
        %v1164 = vshll.u32 %v1079, 16
        %v1166 = vrot.slane %v1164, 5
        %v1167 = vsel %vm500, %v1162, %v1166
        %v1169 = vshrl.u32 %v1080, 16
        %v1171 = vrot.slane %v1169, 4
        %v1172 = vshll.u32 %v1080, 16
        %v1174 = vrot.slane %v1172, 5
        %v1175 = vor.u32 %v1171, %v1174
        %v1176 = vrot.slane %v1175, 4
        %v1178 = vshll.u32 %v1081, 16
        %v1180 = vrot.slane %v1178, 5
        %v1181 = vsel %vm500, %v1176, %v1180
        %v1183 = vshrl.u32 %v1082, 16
        %v1185 = vrot.slane %v1183, 4
        %v1186 = vshll.u32 %v1082, 16
        %v1188 = vrot.slane %v1186, 5
        %v1189 = vor.u32 %v1185, %v1188
        %v1190 = vrot.slane %v1189, 4
        %v1192 = vshll.u32 %v1083, 16
        %v1194 = vrot.slane %v1192, 5
        %v1195 = vsel %vm500, %v1190, %v1194
        %v1196 = vunpack.c.l.b16 %v1097
        %v1197 = vunpack.c.l.b16 %v1111
        %v1198 = vunpack.c.l.b16 %v1125
        %v1199 = vunpack.c.l.b16 %v1139
        %v1200 = vunpack.c.l.b16 %v1153
        %v1201 = vunpack.c.l.b16 %v1167
        %v1202 = vunpack.c.l.b16 %v1181
        %v1203 = vunpack.c.l.b16 %v1195
        %v1204 = vpack.c.b16 %v1197, %v1196
        %v1205 = vpack.c.b16 %v1199, %v1198
        %v1206 = vpack.c.b16 %v1201, %v1200
        %v1207 = vpack.c.b16 %v1203, %v1202
        %1208 = vrot.lane.b32.xlu0 %v1204, 96
        %v1209 = vpop.permute.xlu0 %1208
        %1210 = vrot.lane.b32.xlu0 %v1205, 96
        %v1211 = vpop.permute.xlu0 %1210
        %1212 = vrot.lane.b32.xlu0 %v1206, 96
        %v1213 = vpop.permute.xlu0 %1212
        %1214 = vrot.lane.b32.xlu0 %v1207, 96
        %v1215 = vpop.permute.xlu0 %1214
        %1220 = vst.msk [vmem:[#allocation3 + $0x8] sm:$0xff] %vm778, %v1209
        %1221 = vst.msk [vmem:[#allocation3 + $0x20] sm:$0xff] %vm778, %v1211
        %1222 = vst.msk [vmem:[#allocation3 + $0x38] sm:$0xff] %vm778, %v1213
        %1223 = vst.msk [vmem:[#allocation3 + $0x50] sm:$0xff] %vm778, %v1215
        %v1224 = vld [vmem:[%s1023] sm:$0xe]
        %v1225 = vld [vmem:[%s1023 + $0x4] sm:$0x1]
        %v1226 = vld [vmem:[%s1023 + $0x8] sm:$0xe]
        %v1227 = vld [vmem:[%s1023 + $0xc] sm:$0x1]
        %v1228 = vld [vmem:[%s1023 + $0x10] sm:$0xe]
        %v1229 = vld [vmem:[%s1023 + $0x14] sm:$0x1]
        %v1230 = vld [vmem:[%s1023 + $0x18] sm:$0xe]
        %v1231 = vld [vmem:[%s1023 + $0x1c] sm:$0x1]
        %v1232 = vld [vmem:[%s1023 + $0x20] sm:$0xe]
        %v1233 = vld [vmem:[%s1023 + $0x24] sm:$0x1]
        %v1234 = vld [vmem:[%s1023 + $0x28] sm:$0xe]
        %v1235 = vld [vmem:[%s1023 + $0x2c] sm:$0x1]
        %v1236 = vld [vmem:[%s1023 + $0x30] sm:$0xe]
        %v1237 = vld [vmem:[%s1023 + $0x34] sm:$0x1]
        %v1238 = vld [vmem:[%s1023 + $0x38] sm:$0xe]
        %v1239 = vld [vmem:[%s1023 + $0x3c] sm:$0x1]
        %v1256 = vrot.slane %v1224, 5
        %v1257 = vrot.slane %v1256, 4
        %v1258 = vrot.slane %v1225, 5
        %v1259 = vsel %vm676, %v1257, %v1258
        %v1260 = vrot.slane %v1226, 5
        %v1261 = vrot.slane %v1260, 4
        %v1262 = vrot.slane %v1227, 5
        %v1263 = vsel %vm676, %v1261, %v1262
        %v1264 = vrot.slane %v1228, 5
        %v1265 = vrot.slane %v1264, 4
        %v1266 = vrot.slane %v1229, 5
        %v1267 = vsel %vm676, %v1265, %v1266
        %v1268 = vrot.slane %v1230, 5
        %v1269 = vrot.slane %v1268, 4
        %v1270 = vrot.slane %v1231, 5
        %v1271 = vsel %vm676, %v1269, %v1270
        %v1272 = vrot.slane %v1232, 5
        %v1273 = vrot.slane %v1272, 4
        %v1274 = vrot.slane %v1233, 5
        %v1275 = vsel %vm676, %v1273, %v1274
        %v1276 = vrot.slane %v1234, 5
        %v1277 = vrot.slane %v1276, 4
        %v1278 = vrot.slane %v1235, 5
        %v1279 = vsel %vm676, %v1277, %v1278
        %v1280 = vrot.slane %v1236, 5
        %v1281 = vrot.slane %v1280, 4
        %v1282 = vrot.slane %v1237, 5
        %v1283 = vsel %vm676, %v1281, %v1282
        %v1284 = vrot.slane %v1238, 5
        %v1285 = vrot.slane %v1284, 4
        %v1286 = vrot.slane %v1239, 5
        %v1287 = vsel %vm676, %v1285, %v1286
        %v1288 = vunpack.c.l.b16 %v1259
        %v1289 = vunpack.c.l.b16 %v1263
        %v1290 = vunpack.c.l.b16 %v1267
        %v1291 = vunpack.c.l.b16 %v1271
        %v1292 = vunpack.c.l.b16 %v1275
        %v1293 = vunpack.c.l.b16 %v1279
        %v1294 = vunpack.c.l.b16 %v1283
        %v1295 = vunpack.c.l.b16 %v1287
        %v1296 = vpack.c.b16 %v1289, %v1288
        %v1297 = vpack.c.b16 %v1291, %v1290
        %v1298 = vpack.c.b16 %v1293, %v1292
        %v1299 = vpack.c.b16 %v1295, %v1294
        %1304 = vst.msk [vmem:[#allocation3 + $0x10] sm:$0xff] %vm477, %v1296
        %1305 = vst.msk [vmem:[#allocation3 + $0x28] sm:$0xff] %vm477, %v1297
        %1306 = vst.msk [vmem:[#allocation3 + $0x40] sm:$0xff] %vm477, %v1298
        %1307 = vst.msk [vmem:[#allocation3 + $0x58] sm:$0xff] %vm477, %v1299
        %v1308 = vld [vmem:[#allocation3] sm:$0xff]
        %v1309 = vld [vmem:[#allocation3 + $0x8] sm:$0xff]
        %v1310 = vld [vmem:[#allocation3 + $0x10] sm:$0xff]
        %v1311 = vld [vmem:[#allocation3 + $0x18] sm:$0xff]
        %v1312 = vld [vmem:[#allocation3 + $0x20] sm:$0xff]
        %v1313 = vld [vmem:[#allocation3 + $0x28] sm:$0xff]
        %v1314 = vld [vmem:[#allocation3 + $0x30] sm:$0xff]
        %v1315 = vld [vmem:[#allocation3 + $0x38] sm:$0xff]
        %v1316 = vld [vmem:[#allocation3 + $0x40] sm:$0xff]
        %v1317 = vld [vmem:[#allocation3 + $0x48] sm:$0xff]
        %v1318 = vld [vmem:[#allocation3 + $0x50] sm:$0xff]
        %v1319 = vld [vmem:[#allocation3 + $0x58] sm:$0xff]
        %v1320 = vld [vmem:[#allocation7] sm:$0xf]
        %v1321 = vld [vmem:[#allocation7 + $0x4] sm:$0xf]
        %v1322 = vld [vmem:[#allocation7 + $0x8] sm:$0xf]
        %v1323 = vld [vmem:[#allocation7 + $0xc] sm:$0xf]
        %v1324 = vld [vmem:[#allocation7 + $0x10] sm:$0xf]
        %v1325 = vld [vmem:[#allocation7 + $0x14] sm:$0xf]
        %v1326 = vld [vmem:[#allocation7 + $0x18] sm:$0xf]
        %v1327 = vld [vmem:[#allocation7 + $0x1c] sm:$0xf]
        %v1328 = vld [vmem:[#allocation7 + $0x20] sm:$0xf]
        %v1329 = vld [vmem:[#allocation7 + $0x24] sm:$0xf]
        %v1330 = vld [vmem:[#allocation7 + $0x28] sm:$0xf]
        %v1331 = vld [vmem:[#allocation7 + $0x2c] sm:$0xf]
        %v1332 = vld [vmem:[#allocation7 + $0x30] sm:$0xf]
        %v1333 = vld [vmem:[#allocation7 + $0x34] sm:$0xf]
        %v1334 = vld [vmem:[#allocation7 + $0x38] sm:$0xf]
        %v1335 = vld [vmem:[#allocation7 + $0x3c] sm:$0xf]
        %v1336 = vld [vmem:[#allocation7 + $0x40] sm:$0xf]
        %v1337 = vld [vmem:[#allocation7 + $0x44] sm:$0xf]
        %v1338 = vld [vmem:[#allocation7 + $0x48] sm:$0xf]
        %v1339 = vld [vmem:[#allocation7 + $0x4c] sm:$0xf]
        %v1340 = vld [vmem:[#allocation7 + $0x50] sm:$0xf]
        %v1341 = vld [vmem:[#allocation7 + $0x54] sm:$0xf]
        %v1342 = vld [vmem:[#allocation7 + $0x58] sm:$0xf]
        %v1343 = vld [vmem:[#allocation7 + $0x5c] sm:$0xf]
        %v1344 = vld [vmem:[#allocation7 + $0x60] sm:$0xf]
        %v1345 = vld [vmem:[#allocation7 + $0x64] sm:$0xf]
        %v1346 = vld [vmem:[#allocation7 + $0x68] sm:$0xf]
        %v1347 = vld [vmem:[#allocation7 + $0x6c] sm:$0xf]
        %v1348 = vld [vmem:[#allocation7 + $0x70] sm:$0xf]
        %v1349 = vld [vmem:[#allocation7 + $0x74] sm:$0xf]
        %v1350 = vld [vmem:[#allocation7 + $0x78] sm:$0xf]
        %v1351 = vld [vmem:[#allocation7 + $0x7c] sm:$0xf]
        %v1352 = vld [vmem:[#allocation7 + $0x80] sm:$0xf]
        %v1353 = vld [vmem:[#allocation7 + $0x84] sm:$0xf]
        %v1354 = vld [vmem:[#allocation7 + $0x88] sm:$0xf]
        %v1355 = vld [vmem:[#allocation7 + $0x8c] sm:$0xf]
        %v1392 = vunpack.c.l.b16 %v1320
        %v1393 = vunpack.c.l.b16 %v1321
        %v1394 = vunpack.c.l.b16 %v1322
        %v1395 = vunpack.c.l.b16 %v1323
        %v1396 = vunpack.c.l.b16 %v1324
        %v1397 = vunpack.c.l.b16 %v1325
        %v1398 = vunpack.c.l.b16 %v1326
        %v1399 = vunpack.c.l.b16 %v1327
        %v1400 = vunpack.c.l.b16 %v1328
        %v1401 = vunpack.c.l.b16 %v1329
        %v1402 = vunpack.c.l.b16 %v1330
        %v1403 = vunpack.c.l.b16 %v1331
        %v1404 = vunpack.c.l.b16 %v1332
        %v1405 = vunpack.c.l.b16 %v1333
        %v1406 = vunpack.c.l.b16 %v1334
        %v1407 = vunpack.c.l.b16 %v1335
        %v1408 = vunpack.c.l.b16 %v1336
        %v1409 = vunpack.c.l.b16 %v1337
        %v1410 = vunpack.c.l.b16 %v1338
        %v1411 = vunpack.c.l.b16 %v1339
        %v1412 = vunpack.c.l.b16 %v1340
        %v1413 = vunpack.c.l.b16 %v1341
        %v1414 = vunpack.c.l.b16 %v1342
        %v1415 = vunpack.c.l.b16 %v1343
        %v1416 = vunpack.c.l.b16 %v1344
        %v1417 = vunpack.c.l.b16 %v1345
        %v1418 = vunpack.c.l.b16 %v1346
        %v1419 = vunpack.c.l.b16 %v1347
        %v1420 = vunpack.c.l.b16 %v1348
        %v1421 = vunpack.c.l.b16 %v1349
        %v1422 = vunpack.c.l.b16 %v1350
        %v1423 = vunpack.c.l.b16 %v1351
        %v1424 = vunpack.c.l.b16 %v1352
        %v1425 = vunpack.c.l.b16 %v1353
        %v1426 = vunpack.c.l.b16 %v1354
        %v1427 = vunpack.c.l.b16 %v1355
        %v1428 = vpack.c.b16 %v1393, %v1392
        %v1429 = vpack.c.b16 %v1395, %v1394
        %v1430 = vpack.c.b16 %v1397, %v1396
        %v1431 = vpack.c.b16 %v1399, %v1398
        %v1432 = vpack.c.b16 %v1401, %v1400
        %v1433 = vpack.c.b16 %v1403, %v1402
        %v1434 = vpack.c.b16 %v1405, %v1404
        %v1435 = vpack.c.b16 %v1407, %v1406
        %v1436 = vpack.c.b16 %v1409, %v1408
        %v1437 = vpack.c.b16 %v1411, %v1410
        %v1438 = vpack.c.b16 %v1413, %v1412
        %v1439 = vpack.c.b16 %v1415, %v1414
        %v1440 = vpack.c.b16 %v1417, %v1416
        %v1441 = vpack.c.b16 %v1419, %v1418
        %v1442 = vpack.c.b16 %v1421, %v1420
        %v1443 = vpack.c.b16 %v1423, %v1422
        %v1444 = vpack.c.b16 %v1425, %v1424
        %v1445 = vpack.c.b16 %v1427, %v1426
        %v1465 = vsel %vm477, %v1310, 0
        %v1468 = vsel %vm477, %v1313, 0
        %v1471 = vsel %vm477, %v1316, 0
        %v1474 = vsel %vm477, %v1319, 0
        %1476 = vmatprep.subr.bf16.mxu0 0
        %1477 = vmatpush1.bf16.msra.mxu0 %v1428
        %1478 = vmatprep.subr.bf16.mxu0 0
        %1479 = vmatpush1.bf16.msra.mxu0 %v1429
        %1480 = vmatprep.subr.bf16.mxu0 0
        %1481 = vmatpush1.bf16.msra.mxu0 %v1430
        %1482 = vmatprep.subr.bf16.mxu0 0
        %1483 = vmatpush1.bf16.msra.mxu0 %v1431
        %1484 = vmatprep.subr.bf16.mxu0 0
        %1485 = vmatpush1.bf16.msra.mxu0 %v1432
        %1486 = vmatprep.subr.bf16.mxu0 0
        %1487 = vmatpush1.bf16.msra.mxu0 %v1433
        %1488 = vmatprep.subr.bf16.mxu0 0
        %1489 = vmatpush1.bf16.msra.mxu0 %v1434
        %1490 = vmatprep.subr.bf16.mxu0 0
        %1491 = vmatpush1.bf16.msra.mxu0 %v1435
        %1492 = vmatprep.subr.bf16.mxu0 0
        %1493 = vmatpush1.bf16.msra.mxu0 %v1436
        %1494 = vmatprep.subr.bf16.mxu0 0
        %1495 = vmatpush1.bf16.msra.mxu0 %v1437
        %1496 = vmatprep.subr.bf16.mxu0 0
        %1497 = vmatpush1.bf16.msra.mxu0 %v1438
        %1498 = vmatprep.subr.bf16.mxu0 0
        %1499 = vmatpush1.bf16.msra.mxu0 %v1439
        %1500 = vmatprep.subr.bf16.mxu0 0
        %1501 = vmatpush1.bf16.msra.mxu0 %v1440
        %1502 = vmatprep.subr.bf16.mxu0 0
        %1503 = vmatpush1.bf16.msra.mxu0 %v1441
        %1504 = vmatprep.subr.bf16.mxu0 0
        %1505 = vmatpush1.bf16.msra.mxu0 %v1442
        %1506 = vmatprep.subr.bf16.mxu0 0
        %1507 = vmatpush1.bf16.msra.mxu0 %v1443
        %1508 = vmatprep.mubr.bf16.mxu0 %v1309
        %1509 = vmatmul.mubr.bf16.gmra.mrb[0].mxu0 %v1308
        %v1510 = vpop.f32.mrb[0].mxu0
        %v1511 = vadd.f32 0.0, %v1510
        %v1512 = vpop.f32.mrb[0].mxu0
        %v1513 = vpop.f32.mrb[0].mxu0
        %v1514 = vadd.f32 0.0, %v1513
        %v1515 = vpop.f32.mrb[0].mxu0
        %1516 = vmatprep.mubr.bf16.mxu0 %v1312
        %1517 = vmatmul.mubr.bf16.gmra.mrb[0].mxu0 %v1311
        %v1518 = vpop.f32.mrb[0].mxu0
        %v1519 = vadd.f32 0.0, %v1518
        %v1520 = vpop.f32.mrb[0].mxu0
        %v1521 = vpop.f32.mrb[0].mxu0
        %v1522 = vadd.f32 0.0, %v1521
        %v1523 = vpop.f32.mrb[0].mxu0
        %1524 = vmatprep.mubr.bf16.mxu0 %v1315
        %1525 = vmatmul.mubr.bf16.gmra.mrb[0].mxu0 %v1314
        %v1526 = vpop.f32.mrb[0].mxu0
        %v1527 = vadd.f32 0.0, %v1526
        %v1528 = vpop.f32.mrb[0].mxu0
        %v1529 = vpop.f32.mrb[0].mxu0
        %v1530 = vadd.f32 0.0, %v1529
        %v1531 = vpop.f32.mrb[0].mxu0
        %1532 = vmatprep.mubr.bf16.mxu0 %v1318
        %1533 = vmatmul.mubr.bf16.gmra.mrb[0].mxu0 %v1317
        %v1534 = vpop.f32.mrb[0].mxu0
        %v1535 = vadd.f32 0.0, %v1534
        %v1536 = vpop.f32.mrb[0].mxu0
        %v1537 = vpop.f32.mrb[0].mxu0
        %v1538 = vadd.f32 0.0, %v1537
        %v1539 = vpop.f32.mrb[0].mxu0
        %1540 = vdwg.mxu0
        %1541 = vmatprep.subr.bf16.mxu0 0
        %1542 = vmatpush1.bf16.msra.mxu0 %v1444
        %1543 = vmatprep.subr.bf16.mxu0 0
        %1544 = vmatpush1.bf16.msra.mxu0 %v1445
        %1545 = vmatprep.subr.bf16.mxu0 0
        %1546 = vmatpush1.bf16.msra.mxu0 0
        %1547 = vmatprep.subr.bf16.mxu0 0
        %1548 = vmatpush1.bf16.msra.mxu0 0
        %1549 = vmatprep.subr.bf16.mxu0 0
        %1550 = vmatpush1.bf16.msra.mxu0 0
        %1551 = vmatprep.subr.bf16.mxu0 0
        %1552 = vmatpush1.bf16.msra.mxu0 0
        %1553 = vmatprep.subr.bf16.mxu0 0
        %1554 = vmatpush1.bf16.msra.mxu0 0
        %1555 = vmatprep.subr.bf16.mxu0 0
        %1556 = vmatpush1.bf16.msra.mxu0 0
        %1557 = vmatprep.subr.bf16.mxu0 0
        %1558 = vmatpush1.bf16.msra.mxu0 0
        %1559 = vmatprep.subr.bf16.mxu0 0
        %1560 = vmatpush1.bf16.msra.mxu0 0
        %1561 = vmatprep.subr.bf16.mxu0 0
        %1562 = vmatpush1.bf16.msra.mxu0 0
        %1563 = vmatprep.subr.bf16.mxu0 0
        %1564 = vmatpush1.bf16.msra.mxu0 0
        %1565 = vmatprep.subr.bf16.mxu0 0
        %1566 = vmatpush1.bf16.msra.mxu0 0
        %1567 = vmatprep.subr.bf16.mxu0 0
        %1568 = vmatpush1.bf16.msra.mxu0 0
        %1569 = vmatprep.subr.bf16.mxu0 0
        %1570 = vmatpush1.bf16.msra.mxu0 0
        %1571 = vmatprep.subr.bf16.mxu0 0
        %1572 = vmatpush1.bf16.msra.mxu0 0
        %1573 = vmatprep.mubr.bf16.mxu0 0
        %1574 = vmatmul.mubr.bf16.gmra.mrb[0].mxu0 %v1465
        %v1575 = vpop.f32.mrb[0].mxu0
        %v1576 = vadd.f32 %v1511, %v1575
        %v1577 = vpop.f32.mrb[0].mxu0
        %v1578 = vpop.f32.mrb[0].mxu0
        %v1579 = vadd.f32 %v1514, %v1578
        %v1580 = vpop.f32.mrb[0].mxu0
        %1581 = vmatprep.mubr.bf16.mxu0 0
        %1582 = vmatmul.mubr.bf16.gmra.mrb[0].mxu0 %v1468
        %v1583 = vpop.f32.mrb[0].mxu0
        %v1584 = vadd.f32 %v1519, %v1583
        %v1585 = vpop.f32.mrb[0].mxu0
        %v1586 = vpop.f32.mrb[0].mxu0
        %v1587 = vadd.f32 %v1522, %v1586
        %v1588 = vpop.f32.mrb[0].mxu0
        %1589 = vmatprep.mubr.bf16.mxu0 0
        %1590 = vmatmul.mubr.bf16.gmra.mrb[0].mxu0 %v1471
        %v1591 = vpop.f32.mrb[0].mxu0
        %v1592 = vadd.f32 %v1527, %v1591
        %v1593 = vpop.f32.mrb[0].mxu0
        %v1594 = vpop.f32.mrb[0].mxu0
        %v1595 = vadd.f32 %v1530, %v1594
        %v1596 = vpop.f32.mrb[0].mxu0
        %1597 = vmatprep.mubr.bf16.mxu0 0
        %1598 = vmatmul.mubr.bf16.gmra.mrb[0].mxu0 %v1474
        %v1599 = vpop.f32.mrb[0].mxu0
        %v1600 = vadd.f32 %v1535, %v1599
        %v1601 = vpop.f32.mrb[0].mxu0
        %v1602 = vpop.f32.mrb[0].mxu0
        %v1603 = vadd.f32 %v1538, %v1602
        %v1604 = vpop.f32.mrb[0].mxu0
        %1605 = vdwg.mxu0
        %v1606 = vpack.c.bf16 %v1579, %v1576
        %v1607 = vpack.c.bf16 %v1587, %v1584
        %v1608 = vpack.c.bf16 %v1595, %v1592
        %v1609 = vpack.c.bf16 %v1603, %v1600
        %1614 = vrot.lane.b32.xlu0 %v1606, 96
        %v1615 = vpop.permute.xlu0 %1614
        %1616 = vrot.lane.b32.xlu0 %v1607, 96
        %v1617 = vpop.permute.xlu0 %1616
        %1618 = vrot.lane.b32.xlu0 %v1608, 96
        %v1619 = vpop.permute.xlu0 %1618
        %1620 = vrot.lane.b32.xlu0 %v1609, 96
        %v1621 = vpop.permute.xlu0 %1620
        %vm1622 = vcmask 64512
        %v1624 = vsel %vm1622, %v1606, 0
        %v1627 = vsel %vm1622, %v1607, 0
        %v1630 = vsel %vm1622, %v1608, 0
        %v1633 = vsel %vm1622, %v1609, 0
        %v1636 = vsel %vm1622, %v1615, 0
        %v1639 = vsel %vm1622, %v1617, 0
        %v1642 = vsel %vm1622, %v1619, 0
        %v1645 = vsel %vm1622, %v1621, 0
        %1647 = vmatprep.subr.bf16.mxu0 0
        %1648 = vmatpush1.bf16.xpose.msra.mxu0 %v1636
        %1649 = vmatprep.subr.bf16.mxu0 0
        %1650 = vmatpush1.bf16.xpose.msra.mxu0 %v1639
        %1651 = vmatprep.subr.bf16.mxu0 0
        %1652 = vmatpush1.bf16.xpose.msra.mxu0 %v1642
        %1653 = vmatprep.subr.bf16.mxu0 0
        %1654 = vmatpush1.bf16.xpose.msra.mxu0 %v1645
        %1655 = vmatprep.subr.bf16.mxu0 0
        %1656 = vmatpush1.bf16.xpose.msra.mxu0 0
        %1657 = vmatprep.subr.bf16.mxu0 0
        %1658 = vmatpush1.bf16.xpose.msra.mxu0 0
        %1659 = vmatprep.subr.bf16.mxu0 0
        %1660 = vmatpush1.bf16.xpose.msra.mxu0 0
        %1661 = vmatprep.subr.bf16.mxu0 0
        %1662 = vmatpush1.bf16.xpose.msra.mxu0 0
        %1663 = vmatprep.subr.bf16.mxu0 0
        %1664 = vmatpush1.bf16.xpose.msra.mxu0 0
        %1665 = vmatprep.subr.bf16.mxu0 0
        %1666 = vmatpush1.bf16.xpose.msra.mxu0 0
        %1667 = vmatprep.subr.bf16.mxu0 0
        %1668 = vmatpush1.bf16.xpose.msra.mxu0 0
        %1669 = vmatprep.subr.bf16.mxu0 0
        %1670 = vmatpush1.bf16.xpose.msra.mxu0 0
        %1671 = vmatprep.subr.bf16.mxu0 0
        %1672 = vmatpush1.bf16.xpose.msra.mxu0 0
        %1673 = vmatprep.subr.bf16.mxu0 0
        %1674 = vmatpush1.bf16.xpose.msra.mxu0 0
        %1675 = vmatprep.subr.bf16.mxu0 0
        %1676 = vmatpush1.bf16.xpose.msra.mxu0 0
        %1677 = vmatprep.subr.bf16.mxu0 0
        %1678 = vmatpush1.bf16.xpose.msra.mxu0 0
        %1679 = vmatprep.mubr.bf16.mxu0 0
        %1680 = vmatmul.mubr.bf16.gmra.mrb[0].mxu0 %v1624
        %v1681 = vpop.f32.mrb[0].mxu0
        %v1682 = vadd.f32 0.0, %v1681
        %v1683 = vpop.f32.mrb[0].mxu0
        %v1684 = vpop.f32.mrb[0].mxu0
        %v1685 = vadd.f32 0.0, %v1684
        %v1686 = vpop.f32.mrb[0].mxu0
        %1687 = vmatprep.mubr.bf16.mxu0 0
        %1688 = vmatmul.mubr.bf16.gmra.mrb[0].mxu0 %v1627
        %v1689 = vpop.f32.mrb[0].mxu0
        %v1690 = vadd.f32 0.0, %v1689
        %v1691 = vpop.f32.mrb[0].mxu0
        %v1692 = vpop.f32.mrb[0].mxu0
        %v1693 = vadd.f32 0.0, %v1692
        %v1694 = vpop.f32.mrb[0].mxu0
        %1695 = vmatprep.mubr.bf16.mxu0 0
        %1696 = vmatmul.mubr.bf16.gmra.mrb[0].mxu0 %v1630
        %v1697 = vpop.f32.mrb[0].mxu0
        %v1698 = vadd.f32 0.0, %v1697
        %v1699 = vpop.f32.mrb[0].mxu0
        %v1700 = vpop.f32.mrb[0].mxu0
        %v1701 = vadd.f32 0.0, %v1700
        %v1702 = vpop.f32.mrb[0].mxu0
        %1703 = vmatprep.mubr.bf16.mxu0 0
        %1704 = vmatmul.mubr.bf16.gmra.mrb[0].mxu0 %v1633
        %v1705 = vpop.f32.mrb[0].mxu0
        %v1706 = vadd.f32 0.0, %v1705
        %v1707 = vpop.f32.mrb[0].mxu0
        %v1708 = vpop.f32.mrb[0].mxu0
        %v1709 = vadd.f32 0.0, %v1708
        %v1710 = vpop.f32.mrb[0].mxu0
        %1711 = vdwg.mxu0
        %vm1712 = vcmask 523264
        %v1713 = vsel %vm1712, %v1682, -inf
        %1714 = vmax.xlane.f32.xlu0 %v1713
        %v1715 = vpop.xlane.xlu0 %1714
        %v1716 = vsel %vm1712, %v1685, -inf
        %1717 = vmax.xlane.f32.xlu0 %v1716
        %v1718 = vpop.xlane.xlu0 %1717
        %v1719 = vsel %vm1712, %v1690, -inf
        %1720 = vmax.xlane.f32.xlu0 %v1719
        %v1721 = vpop.xlane.xlu0 %1720
        %v1722 = vsel %vm1712, %v1693, -inf
        %1723 = vmax.xlane.f32.xlu0 %v1722
        %v1724 = vpop.xlane.xlu0 %1723
        %v1725 = vsel %vm1712, %v1698, -inf
        %1726 = vmax.xlane.f32.xlu0 %v1725
        %v1727 = vpop.xlane.xlu0 %1726
        %v1728 = vsel %vm1712, %v1701, -inf
        %1729 = vmax.xlane.f32.xlu0 %v1728
        %v1730 = vpop.xlane.xlu0 %1729
        %v1731 = vsel %vm1712, %v1706, -inf
        %1732 = vmax.xlane.f32.xlu0 %v1731
        %v1733 = vpop.xlane.xlu0 %1732
        %v1734 = vsel %vm1712, %v1709, -inf
        %1735 = vmax.xlane.f32.xlu0 %v1734
        %v1736 = vpop.xlane.xlu0 %1735
        %v1737 = vsub.f32 %v1682, %v1715
        %v1738 = vsub.f32 %v1685, %v1718
        %v1739 = vsub.f32 %v1690, %v1721
        %v1740 = vsub.f32 %v1693, %v1724
        %v1741 = vsub.f32 %v1698, %v1727
        %v1742 = vsub.f32 %v1701, %v1730
        %v1743 = vsub.f32 %v1706, %v1733
        %v1744 = vsub.f32 %v1709, %v1736
        %v1745 = vmul.f32 %v1737, 1.442695
        %v1746 = vpow.pop %v1745
        %v1747 = vmul.f32 %v1738, 1.442695
        %v1748 = vpow.pop %v1747
        %v1749 = vmul.f32 %v1739, 1.442695
        %v1750 = vpow.pop %v1749
        %v1751 = vmul.f32 %v1740, 1.442695
        %v1752 = vpow.pop %v1751
        %v1753 = vmul.f32 %v1741, 1.442695
        %v1754 = vpow.pop %v1753
        %v1755 = vmul.f32 %v1742, 1.442695
        %v1756 = vpow.pop %v1755
        %v1757 = vmul.f32 %v1743, 1.442695
        %v1758 = vpow.pop %v1757
        %v1759 = vmul.f32 %v1744, 1.442695
        %v1760 = vpow.pop %v1759
        %v1761 = vsel %vm1712, %v1746, 0.0
        %1762 = vadd.xlane.f32.xlu0 %v1761
        %v1763 = vpop.xlane.xlu0 %1762
        %v1764 = vsel %vm1712, %v1748, 0.0
        %1765 = vadd.xlane.f32.xlu0 %v1764
        %v1766 = vpop.xlane.xlu0 %1765
        %v1767 = vsel %vm1712, %v1750, 0.0
        %1768 = vadd.xlane.f32.xlu0 %v1767
        %v1769 = vpop.xlane.xlu0 %1768
        %v1770 = vsel %vm1712, %v1752, 0.0
        %1771 = vadd.xlane.f32.xlu0 %v1770
        %v1772 = vpop.xlane.xlu0 %1771
        %v1773 = vsel %vm1712, %v1754, 0.0
        %1774 = vadd.xlane.f32.xlu0 %v1773
        %v1775 = vpop.xlane.xlu0 %1774
        %v1776 = vsel %vm1712, %v1756, 0.0
        %1777 = vadd.xlane.f32.xlu0 %v1776
        %v1778 = vpop.xlane.xlu0 %1777
        %v1779 = vsel %vm1712, %v1758, 0.0
        %1780 = vadd.xlane.f32.xlu0 %v1779
        %v1781 = vpop.xlane.xlu0 %1780
        %v1782 = vsel %vm1712, %v1760, 0.0
        %1783 = vadd.xlane.f32.xlu0 %v1782
        %v1784 = vpop.xlane.xlu0 %1783
        %v1785 = vpack.c.bf16 %v1748, %v1746
        %v1786 = vpack.c.bf16 %v1752, %v1750
        %v1787 = vpack.c.bf16 %v1756, %v1754
        %v1788 = vpack.c.bf16 %v1760, %v1758
        %1789 = vrot.lane.b32.xlu0 %v1606, 64
        %v1790 = vpop.permute.xlu0 %1789
        %1791 = vrot.lane.b32.xlu0 %v1607, 64
        %v1792 = vpop.permute.xlu0 %1791
        %1793 = vrot.lane.b32.xlu0 %v1608, 64
        %v1794 = vpop.permute.xlu0 %1793
        %1795 = vrot.lane.b32.xlu0 %v1609, 64
        %v1796 = vpop.permute.xlu0 %1795
        %v1802 = vsel %vm1712, %v1785, 0
        %v1805 = vsel %vm1712, %v1786, 0
        %v1808 = vsel %vm1712, %v1787, 0
        %v1811 = vsel %vm1712, %v1788, 0
        %1813 = vmatprep.subr.bf16.mxu0 0
        %1814 = vmatpush1.bf16.msra.mxu0 %v1790
        %1815 = vmatprep.subr.bf16.mxu0 0
        %1816 = vmatpush1.bf16.msra.mxu0 %v1792
        %1817 = vmatprep.subr.bf16.mxu0 0
        %1818 = vmatpush1.bf16.msra.mxu0 %v1794
        %1819 = vmatprep.subr.bf16.mxu0 0
        %1820 = vmatpush1.bf16.msra.mxu0 %v1796
        %1821 = vmatprep.subr.bf16.mxu0 0
        %1822 = vmatpush1.bf16.msra.mxu0 0
        %1823 = vmatprep.subr.bf16.mxu0 0
        %1824 = vmatpush1.bf16.msra.mxu0 0
        %1825 = vmatprep.subr.bf16.mxu0 0
        %1826 = vmatpush1.bf16.msra.mxu0 0
        %1827 = vmatprep.subr.bf16.mxu0 0
        %1828 = vmatpush1.bf16.msra.mxu0 0
        %1829 = vmatprep.subr.bf16.mxu0 0
        %1830 = vmatpush1.bf16.msra.mxu0 0
        %1831 = vmatprep.subr.bf16.mxu0 0
        %1832 = vmatpush1.bf16.msra.mxu0 0
        %1833 = vmatprep.subr.bf16.mxu0 0
        %1834 = vmatpush1.bf16.msra.mxu0 0
        %1835 = vmatprep.subr.bf16.mxu0 0
        %1836 = vmatpush1.bf16.msra.mxu0 0
        %1837 = vmatprep.subr.bf16.mxu0 0
        %1838 = vmatpush1.bf16.msra.mxu0 0
        %1839 = vmatprep.subr.bf16.mxu0 0
        %1840 = vmatpush1.bf16.msra.mxu0 0
        %1841 = vmatprep.subr.bf16.mxu0 0
        %1842 = vmatpush1.bf16.msra.mxu0 0
        %1843 = vmatprep.subr.bf16.mxu0 0
        %1844 = vmatpush1.bf16.msra.mxu0 0
        %1845 = vmatprep.mubr.bf16.mxu0 0
        %1846 = vmatmul.mubr.bf16.gmra.mrb[0].mxu0 %v1802
        %v1847 = vpop.f32.mrb[0].mxu0
        %v1848 = vadd.f32 0.0, %v1847
        %v1849 = vpop.f32.mrb[0].mxu0
        %v1850 = vpop.f32.mrb[0].mxu0
        %v1851 = vadd.f32 0.0, %v1850
        %v1852 = vpop.f32.mrb[0].mxu0
        %1853 = vmatprep.mubr.bf16.mxu0 0
        %1854 = vmatmul.mubr.bf16.gmra.mrb[0].mxu0 %v1805
        %v1855 = vpop.f32.mrb[0].mxu0
        %v1856 = vadd.f32 0.0, %v1855
        %v1857 = vpop.f32.mrb[0].mxu0
        %v1858 = vpop.f32.mrb[0].mxu0
        %v1859 = vadd.f32 0.0, %v1858
        %v1860 = vpop.f32.mrb[0].mxu0
        %1861 = vmatprep.mubr.bf16.mxu0 0
        %1862 = vmatmul.mubr.bf16.gmra.mrb[0].mxu0 %v1808
        %v1863 = vpop.f32.mrb[0].mxu0
        %v1864 = vadd.f32 0.0, %v1863
        %v1865 = vpop.f32.mrb[0].mxu0
        %v1866 = vpop.f32.mrb[0].mxu0
        %v1867 = vadd.f32 0.0, %v1866
        %v1868 = vpop.f32.mrb[0].mxu0
        %1869 = vmatprep.mubr.bf16.mxu0 0
        %1870 = vmatmul.mubr.bf16.gmra.mrb[0].mxu0 %v1811
        %v1871 = vpop.f32.mrb[0].mxu0
        %v1872 = vadd.f32 0.0, %v1871
        %v1873 = vpop.f32.mrb[0].mxu0
        %v1874 = vpop.f32.mrb[0].mxu0
        %v1875 = vadd.f32 0.0, %v1874
        %v1876 = vpop.f32.mrb[0].mxu0
        %1877 = vdwg.mxu0
        %v1878 = vrcp.pop %v1763
        %v1879 = vrcp.pop %v1766
        %v1880 = vrcp.pop %v1769
        %v1881 = vrcp.pop %v1772
        %v1882 = vrcp.pop %v1775
        %v1883 = vrcp.pop %v1778
        %v1884 = vrcp.pop %v1781
        %v1885 = vrcp.pop %v1784
        %v1886 = vmul.f32 %v1848, %v1878
        %v1887 = vmul.f32 %v1851, %v1879
        %v1888 = vmul.f32 %v1856, %v1880
        %v1889 = vmul.f32 %v1859, %v1881
        %v1890 = vmul.f32 %v1864, %v1882
        %v1891 = vmul.f32 %v1867, %v1883
        %v1892 = vmul.f32 %v1872, %v1884
        %v1893 = vmul.f32 %v1875, %v1885
        %1894 = vst.msk [vmem:[#allocation4] sm:$0xff] %vm1622, %v1886
        %1895 = vst.msk [vmem:[#allocation4 + $0x8] sm:$0xff] %vm1622, %v1887
        %1896 = vst.msk [vmem:[#allocation4 + $0x10] sm:$0xff] %vm1622, %v1888
        %1897 = vst.msk [vmem:[#allocation4 + $0x18] sm:$0xff] %vm1622, %v1889
        %1898 = vst.msk [vmem:[#allocation4 + $0x20] sm:$0xff] %vm1622, %v1890
        %1899 = vst.msk [vmem:[#allocation4 + $0x28] sm:$0xff] %vm1622, %v1891
        %1900 = vst.msk [vmem:[#allocation4 + $0x30] sm:$0xff] %vm1622, %v1892
        %1901 = vst.msk [vmem:[#allocation4 + $0x38] sm:$0xff] %vm1622, %v1893
        %1902 = vrot.lane.b32.xlu0 %v1606, 120
        %v1903 = vpop.permute.xlu0 %1902
        %1904 = vrot.lane.b32.xlu0 %v1607, 120
        %v1905 = vpop.permute.xlu0 %1904
        %1906 = vrot.lane.b32.xlu0 %v1608, 120
        %v1907 = vpop.permute.xlu0 %1906
        %1908 = vrot.lane.b32.xlu0 %v1609, 120
        %v1909 = vpop.permute.xlu0 %1908
        %1910 = vrot.lane.b32.xlu0 %v1606, 88
        %v1911 = vpop.permute.xlu0 %1910
        %1912 = vrot.lane.b32.xlu0 %v1607, 88
        %v1913 = vpop.permute.xlu0 %1912
        %1914 = vrot.lane.b32.xlu0 %v1608, 88
        %v1915 = vpop.permute.xlu0 %1914
        %1916 = vrot.lane.b32.xlu0 %v1609, 88
        %v1917 = vpop.permute.xlu0 %1916
        %v1919 = vsel %vm1622, %v1903, 0
        %v1922 = vsel %vm1622, %v1905, 0
        %v1925 = vsel %vm1622, %v1907, 0
        %v1928 = vsel %vm1622, %v1909, 0
        %v1931 = vsel %vm1622, %v1911, 0
        %v1934 = vsel %vm1622, %v1913, 0
        %v1937 = vsel %vm1622, %v1915, 0
        %v1940 = vsel %vm1622, %v1917, 0
        %1942 = vmatprep.subr.bf16.mxu0 0
        %1943 = vmatpush1.bf16.xpose.msra.mxu0 %v1931
        %1944 = vmatprep.subr.bf16.mxu0 0
        %1945 = vmatpush1.bf16.xpose.msra.mxu0 %v1934
        %1946 = vmatprep.subr.bf16.mxu0 0
        %1947 = vmatpush1.bf16.xpose.msra.mxu0 %v1937
        %1948 = vmatprep.subr.bf16.mxu0 0
        %1949 = vmatpush1.bf16.xpose.msra.mxu0 %v1940
        %1950 = vmatprep.subr.bf16.mxu0 0
        %1951 = vmatpush1.bf16.xpose.msra.mxu0 0
        %1952 = vmatprep.subr.bf16.mxu0 0
        %1953 = vmatpush1.bf16.xpose.msra.mxu0 0
        %1954 = vmatprep.subr.bf16.mxu0 0
        %1955 = vmatpush1.bf16.xpose.msra.mxu0 0
        %1956 = vmatprep.subr.bf16.mxu0 0
        %1957 = vmatpush1.bf16.xpose.msra.mxu0 0
        %1958 = vmatprep.subr.bf16.mxu0 0
        %1959 = vmatpush1.bf16.xpose.msra.mxu0 0
        %1960 = vmatprep.subr.bf16.mxu0 0
        %1961 = vmatpush1.bf16.xpose.msra.mxu0 0
        %1962 = vmatprep.subr.bf16.mxu0 0
        %1963 = vmatpush1.bf16.xpose.msra.mxu0 0
        %1964 = vmatprep.subr.bf16.mxu0 0
        %1965 = vmatpush1.bf16.xpose.msra.mxu0 0
        %1966 = vmatprep.subr.bf16.mxu0 0
        %1967 = vmatpush1.bf16.xpose.msra.mxu0 0
        %1968 = vmatprep.subr.bf16.mxu0 0
        %1969 = vmatpush1.bf16.xpose.msra.mxu0 0
        %1970 = vmatprep.subr.bf16.mxu0 0
        %1971 = vmatpush1.bf16.xpose.msra.mxu0 0
        %1972 = vmatprep.subr.bf16.mxu0 0
        %1973 = vmatpush1.bf16.xpose.msra.mxu0 0
        %1974 = vmatprep.mubr.bf16.mxu0 0
        %1975 = vmatmul.mubr.bf16.gmra.mrb[0].mxu0 %v1919
        %v1976 = vpop.f32.mrb[0].mxu0
        %v1977 = vadd.f32 0.0, %v1976
        %v1978 = vpop.f32.mrb[0].mxu0
        %v1979 = vpop.f32.mrb[0].mxu0
        %v1980 = vadd.f32 0.0, %v1979
        %v1981 = vpop.f32.mrb[0].mxu0
        %1982 = vmatprep.mubr.bf16.mxu0 0
        %1983 = vmatmul.mubr.bf16.gmra.mrb[0].mxu0 %v1922
        %v1984 = vpop.f32.mrb[0].mxu0
        %v1985 = vadd.f32 0.0, %v1984
        %v1986 = vpop.f32.mrb[0].mxu0
        %v1987 = vpop.f32.mrb[0].mxu0
        %v1988 = vadd.f32 0.0, %v1987
        %v1989 = vpop.f32.mrb[0].mxu0
        %1990 = vmatprep.mubr.bf16.mxu0 0
        %1991 = vmatmul.mubr.bf16.gmra.mrb[0].mxu0 %v1925
        %v1992 = vpop.f32.mrb[0].mxu0
        %v1993 = vadd.f32 0.0, %v1992
        %v1994 = vpop.f32.mrb[0].mxu0
        %v1995 = vpop.f32.mrb[0].mxu0
        %v1996 = vadd.f32 0.0, %v1995
        %v1997 = vpop.f32.mrb[0].mxu0
        %1998 = vmatprep.mubr.bf16.mxu0 0
        %1999 = vmatmul.mubr.bf16.gmra.mrb[0].mxu0 %v1928
        %v2000 = vpop.f32.mrb[0].mxu0
        %v2001 = vadd.f32 0.0, %v2000
        %v2002 = vpop.f32.mrb[0].mxu0
        %v2003 = vpop.f32.mrb[0].mxu0
        %v2004 = vadd.f32 0.0, %v2003
        %v2005 = vpop.f32.mrb[0].mxu0
        %2006 = vdwg.mxu0
        %v2007 = vsel %vm1712, %v1977, -inf
        %2008 = vmax.xlane.f32.xlu0 %v2007
        %v2009 = vpop.xlane.xlu0 %2008
        %v2010 = vsel %vm1712, %v1980, -inf
        %2011 = vmax.xlane.f32.xlu0 %v2010
        %v2012 = vpop.xlane.xlu0 %2011
        %v2013 = vsel %vm1712, %v1985, -inf
        %2014 = vmax.xlane.f32.xlu0 %v2013
        %v2015 = vpop.xlane.xlu0 %2014
        %v2016 = vsel %vm1712, %v1988, -inf
        %2017 = vmax.xlane.f32.xlu0 %v2016
        %v2018 = vpop.xlane.xlu0 %2017
        %v2019 = vsel %vm1712, %v1993, -inf
        %2020 = vmax.xlane.f32.xlu0 %v2019
        %v2021 = vpop.xlane.xlu0 %2020
        %v2022 = vsel %vm1712, %v1996, -inf
        %2023 = vmax.xlane.f32.xlu0 %v2022
        %v2024 = vpop.xlane.xlu0 %2023
        %v2025 = vsel %vm1712, %v2001, -inf
        %2026 = vmax.xlane.f32.xlu0 %v2025
        %v2027 = vpop.xlane.xlu0 %2026
        %v2028 = vsel %vm1712, %v2004, -inf
        %2029 = vmax.xlane.f32.xlu0 %v2028
        %v2030 = vpop.xlane.xlu0 %2029
        %v2031 = vsub.f32 %v1977, %v2009
        %v2032 = vsub.f32 %v1980, %v2012
        %v2033 = vsub.f32 %v1985, %v2015
        %v2034 = vsub.f32 %v1988, %v2018
        %v2035 = vsub.f32 %v1993, %v2021
        %v2036 = vsub.f32 %v1996, %v2024
        %v2037 = vsub.f32 %v2001, %v2027
        %v2038 = vsub.f32 %v2004, %v2030
        %v2039 = vmul.f32 %v2031, 1.442695
        %v2040 = vpow.pop %v2039
        %v2041 = vmul.f32 %v2032, 1.442695
        %v2042 = vpow.pop %v2041
        %v2043 = vmul.f32 %v2033, 1.442695
        %v2044 = vpow.pop %v2043
        %v2045 = vmul.f32 %v2034, 1.442695
        %v2046 = vpow.pop %v2045
        %v2047 = vmul.f32 %v2035, 1.442695
        %v2048 = vpow.pop %v2047
        %v2049 = vmul.f32 %v2036, 1.442695
        %v2050 = vpow.pop %v2049
        %v2051 = vmul.f32 %v2037, 1.442695
        %v2052 = vpow.pop %v2051
        %v2053 = vmul.f32 %v2038, 1.442695
        %v2054 = vpow.pop %v2053
        %v2055 = vsel %vm1712, %v2040, 0.0
        %2056 = vadd.xlane.f32.xlu0 %v2055
        %v2057 = vpop.xlane.xlu0 %2056
        %v2058 = vsel %vm1712, %v2042, 0.0
        %2059 = vadd.xlane.f32.xlu0 %v2058
        %v2060 = vpop.xlane.xlu0 %2059
        %v2061 = vsel %vm1712, %v2044, 0.0
        %2062 = vadd.xlane.f32.xlu0 %v2061
        %v2063 = vpop.xlane.xlu0 %2062
        %v2064 = vsel %vm1712, %v2046, 0.0
        %2065 = vadd.xlane.f32.xlu0 %v2064
        %v2066 = vpop.xlane.xlu0 %2065
        %v2067 = vsel %vm1712, %v2048, 0.0
        %2068 = vadd.xlane.f32.xlu0 %v2067
        %v2069 = vpop.xlane.xlu0 %2068
        %v2070 = vsel %vm1712, %v2050, 0.0
        %2071 = vadd.xlane.f32.xlu0 %v2070
        %v2072 = vpop.xlane.xlu0 %2071
        %v2073 = vsel %vm1712, %v2052, 0.0
        %2074 = vadd.xlane.f32.xlu0 %v2073
        %v2075 = vpop.xlane.xlu0 %2074
        %v2076 = vsel %vm1712, %v2054, 0.0
        %2077 = vadd.xlane.f32.xlu0 %v2076
        %v2078 = vpop.xlane.xlu0 %2077
        %v2079 = vpack.c.bf16 %v2042, %v2040
        %v2080 = vpack.c.bf16 %v2046, %v2044
        %v2081 = vpack.c.bf16 %v2050, %v2048
        %v2082 = vpack.c.bf16 %v2054, %v2052
        %2083 = vrot.lane.b32.xlu0 %v1606, 56
        %v2084 = vpop.permute.xlu0 %2083
        %2085 = vrot.lane.b32.xlu0 %v1607, 56
        %v2086 = vpop.permute.xlu0 %2085
        %2087 = vrot.lane.b32.xlu0 %v1608, 56
        %v2088 = vpop.permute.xlu0 %2087
        %2089 = vrot.lane.b32.xlu0 %v1609, 56
        %v2090 = vpop.permute.xlu0 %2089
        %v2096 = vsel %vm1712, %v2079, 0
        %v2099 = vsel %vm1712, %v2080, 0
        %v2102 = vsel %vm1712, %v2081, 0
        %v2105 = vsel %vm1712, %v2082, 0
        %2107 = vmatprep.subr.bf16.mxu0 0
        %2108 = vmatpush1.bf16.msra.mxu0 %v2084
        %2109 = vmatprep.subr.bf16.mxu0 0
        %2110 = vmatpush1.bf16.msra.mxu0 %v2086
        %2111 = vmatprep.subr.bf16.mxu0 0
        %2112 = vmatpush1.bf16.msra.mxu0 %v2088
        %2113 = vmatprep.subr.bf16.mxu0 0
        %2114 = vmatpush1.bf16.msra.mxu0 %v2090
        %2115 = vmatprep.subr.bf16.mxu0 0
        %2116 = vmatpush1.bf16.msra.mxu0 0
        %2117 = vmatprep.subr.bf16.mxu0 0
        %2118 = vmatpush1.bf16.msra.mxu0 0
        %2119 = vmatprep.subr.bf16.mxu0 0
        %2120 = vmatpush1.bf16.msra.mxu0 0
        %2121 = vmatprep.subr.bf16.mxu0 0
        %2122 = vmatpush1.bf16.msra.mxu0 0
        %2123 = vmatprep.subr.bf16.mxu0 0
        %2124 = vmatpush1.bf16.msra.mxu0 0
        %2125 = vmatprep.subr.bf16.mxu0 0
        %2126 = vmatpush1.bf16.msra.mxu0 0
        %2127 = vmatprep.subr.bf16.mxu0 0
        %2128 = vmatpush1.bf16.msra.mxu0 0
        %2129 = vmatprep.subr.bf16.mxu0 0
        %2130 = vmatpush1.bf16.msra.mxu0 0
        %2131 = vmatprep.subr.bf16.mxu0 0
        %2132 = vmatpush1.bf16.msra.mxu0 0
        %2133 = vmatprep.subr.bf16.mxu0 0
        %2134 = vmatpush1.bf16.msra.mxu0 0
        %2135 = vmatprep.subr.bf16.mxu0 0
        %2136 = vmatpush1.bf16.msra.mxu0 0
        %2137 = vmatprep.subr.bf16.mxu0 0
        %2138 = vmatpush1.bf16.msra.mxu0 0
        %2139 = vmatprep.mubr.bf16.mxu0 0
        %2140 = vmatmul.mubr.bf16.gmra.mrb[0].mxu0 %v2096
        %v2141 = vpop.f32.mrb[0].mxu0
        %v2142 = vadd.f32 0.0, %v2141
        %v2143 = vpop.f32.mrb[0].mxu0
        %v2144 = vpop.f32.mrb[0].mxu0
        %v2145 = vadd.f32 0.0, %v2144
        %v2146 = vpop.f32.mrb[0].mxu0
        %2147 = vmatprep.mubr.bf16.mxu0 0
        %2148 = vmatmul.mubr.bf16.gmra.mrb[0].mxu0 %v2099
        %v2149 = vpop.f32.mrb[0].mxu0
        %v2150 = vadd.f32 0.0, %v2149
        %v2151 = vpop.f32.mrb[0].mxu0
        %v2152 = vpop.f32.mrb[0].mxu0
        %v2153 = vadd.f32 0.0, %v2152
        %v2154 = vpop.f32.mrb[0].mxu0
        %2155 = vmatprep.mubr.bf16.mxu0 0
        %2156 = vmatmul.mubr.bf16.gmra.mrb[0].mxu0 %v2102
        %v2157 = vpop.f32.mrb[0].mxu0
        %v2158 = vadd.f32 0.0, %v2157
        %v2159 = vpop.f32.mrb[0].mxu0
        %v2160 = vpop.f32.mrb[0].mxu0
        %v2161 = vadd.f32 0.0, %v2160
        %v2162 = vpop.f32.mrb[0].mxu0
        %2163 = vmatprep.mubr.bf16.mxu0 0
        %2164 = vmatmul.mubr.bf16.gmra.mrb[0].mxu0 %v2105
        %v2165 = vpop.f32.mrb[0].mxu0
        %v2166 = vadd.f32 0.0, %v2165
        %v2167 = vpop.f32.mrb[0].mxu0
        %v2168 = vpop.f32.mrb[0].mxu0
        %v2169 = vadd.f32 0.0, %v2168
        %v2170 = vpop.f32.mrb[0].mxu0
        %2171 = vdwg.mxu0
        %v2172 = vrcp.pop %v2057
        %v2173 = vrcp.pop %v2060
        %v2174 = vrcp.pop %v2063
        %v2175 = vrcp.pop %v2066
        %v2176 = vrcp.pop %v2069
        %v2177 = vrcp.pop %v2072
        %v2178 = vrcp.pop %v2075
        %v2179 = vrcp.pop %v2078
        %v2180 = vmul.f32 %v2142, %v2172
        %v2181 = vmul.f32 %v2145, %v2173
        %v2182 = vmul.f32 %v2150, %v2174
        %v2183 = vmul.f32 %v2153, %v2175
        %v2184 = vmul.f32 %v2158, %v2176
        %v2185 = vmul.f32 %v2161, %v2177
        %v2186 = vmul.f32 %v2166, %v2178
        %v2187 = vmul.f32 %v2169, %v2179
        %2196 = vrot.lane.b32.xlu0 %v2180, 8
        %v2197 = vpop.permute.xlu0 %2196
        %2198 = vrot.lane.b32.xlu0 %v2181, 8
        %v2199 = vpop.permute.xlu0 %2198
        %2200 = vrot.lane.b32.xlu0 %v2182, 8
        %v2201 = vpop.permute.xlu0 %2200
        %2202 = vrot.lane.b32.xlu0 %v2183, 8
        %v2203 = vpop.permute.xlu0 %2202
        %2204 = vrot.lane.b32.xlu0 %v2184, 8
        %v2205 = vpop.permute.xlu0 %2204
        %2206 = vrot.lane.b32.xlu0 %v2185, 8
        %v2207 = vpop.permute.xlu0 %2206
        %2208 = vrot.lane.b32.xlu0 %v2186, 8
        %v2209 = vpop.permute.xlu0 %2208
        %2210 = vrot.lane.b32.xlu0 %v2187, 8
        %v2211 = vpop.permute.xlu0 %2210
        %vm2220 = vcmask 130112
        %2221 = vst.msk [vmem:[#allocation4] sm:$0xff] %vm2220, %v2197
        %2222 = vst.msk [vmem:[#allocation4 + $0x8] sm:$0xff] %vm2220, %v2199
        %2223 = vst.msk [vmem:[#allocation4 + $0x10] sm:$0xff] %vm2220, %v2201
        %2224 = vst.msk [vmem:[#allocation4 + $0x18] sm:$0xff] %vm2220, %v2203
        %2225 = vst.msk [vmem:[#allocation4 + $0x20] sm:$0xff] %vm2220, %v2205
        %2226 = vst.msk [vmem:[#allocation4 + $0x28] sm:$0xff] %vm2220, %v2207
        %2227 = vst.msk [vmem:[#allocation4 + $0x30] sm:$0xff] %vm2220, %v2209
        %2228 = vst.msk [vmem:[#allocation4 + $0x38] sm:$0xff] %vm2220, %v2211
        %2229 = vrot.lane.b32.xlu0 %v1606, 112
        %v2230 = vpop.permute.xlu0 %2229
        %2231 = vrot.lane.b32.xlu0 %v1607, 112
        %v2232 = vpop.permute.xlu0 %2231
        %2233 = vrot.lane.b32.xlu0 %v1608, 112
        %v2234 = vpop.permute.xlu0 %2233
        %2235 = vrot.lane.b32.xlu0 %v1609, 112
        %v2236 = vpop.permute.xlu0 %2235
        %2237 = vrot.lane.b32.xlu0 %v1606, 80
        %v2238 = vpop.permute.xlu0 %2237
        %2239 = vrot.lane.b32.xlu0 %v1607, 80
        %v2240 = vpop.permute.xlu0 %2239
        %2241 = vrot.lane.b32.xlu0 %v1608, 80
        %v2242 = vpop.permute.xlu0 %2241
        %2243 = vrot.lane.b32.xlu0 %v1609, 80
        %v2244 = vpop.permute.xlu0 %2243
        %v2246 = vsel %vm1622, %v2230, 0
        %v2249 = vsel %vm1622, %v2232, 0
        %v2252 = vsel %vm1622, %v2234, 0
        %v2255 = vsel %vm1622, %v2236, 0
        %v2258 = vsel %vm1622, %v2238, 0
        %v2261 = vsel %vm1622, %v2240, 0
        %v2264 = vsel %vm1622, %v2242, 0
        %v2267 = vsel %vm1622, %v2244, 0
        %2269 = vmatprep.subr.bf16.mxu0 0
        %2270 = vmatpush1.bf16.xpose.msra.mxu0 %v2258
        %2271 = vmatprep.subr.bf16.mxu0 0
        %2272 = vmatpush1.bf16.xpose.msra.mxu0 %v2261
        %2273 = vmatprep.subr.bf16.mxu0 0
        %2274 = vmatpush1.bf16.xpose.msra.mxu0 %v2264
        %2275 = vmatprep.subr.bf16.mxu0 0
        %2276 = vmatpush1.bf16.xpose.msra.mxu0 %v2267
        %2277 = vmatprep.subr.bf16.mxu0 0
        %2278 = vmatpush1.bf16.xpose.msra.mxu0 0
        %2279 = vmatprep.subr.bf16.mxu0 0
        %2280 = vmatpush1.bf16.xpose.msra.mxu0 0
        %2281 = vmatprep.subr.bf16.mxu0 0
        %2282 = vmatpush1.bf16.xpose.msra.mxu0 0
        %2283 = vmatprep.subr.bf16.mxu0 0
        %2284 = vmatpush1.bf16.xpose.msra.mxu0 0
        %2285 = vmatprep.subr.bf16.mxu0 0
        %2286 = vmatpush1.bf16.xpose.msra.mxu0 0
        %2287 = vmatprep.subr.bf16.mxu0 0
        %2288 = vmatpush1.bf16.xpose.msra.mxu0 0
        %2289 = vmatprep.subr.bf16.mxu0 0
        %2290 = vmatpush1.bf16.xpose.msra.mxu0 0
        %2291 = vmatprep.subr.bf16.mxu0 0
        %2292 = vmatpush1.bf16.xpose.msra.mxu0 0
        %2293 = vmatprep.subr.bf16.mxu0 0
        %2294 = vmatpush1.bf16.xpose.msra.mxu0 0
        %2295 = vmatprep.subr.bf16.mxu0 0
        %2296 = vmatpush1.bf16.xpose.msra.mxu0 0
        %2297 = vmatprep.subr.bf16.mxu0 0
        %2298 = vmatpush1.bf16.xpose.msra.mxu0 0
        %2299 = vmatprep.subr.bf16.mxu0 0
        %2300 = vmatpush1.bf16.xpose.msra.mxu0 0
        %2301 = vmatprep.mubr.bf16.mxu0 0
        %2302 = vmatmul.mubr.bf16.gmra.mrb[0].mxu0 %v2246
        %v2303 = vpop.f32.mrb[0].mxu0
        %v2304 = vadd.f32 0.0, %v2303
        %v2305 = vpop.f32.mrb[0].mxu0
        %v2306 = vpop.f32.mrb[0].mxu0
        %v2307 = vadd.f32 0.0, %v2306
        %v2308 = vpop.f32.mrb[0].mxu0
        %2309 = vmatprep.mubr.bf16.mxu0 0
        %2310 = vmatmul.mubr.bf16.gmra.mrb[0].mxu0 %v2249
        %v2311 = vpop.f32.mrb[0].mxu0
        %v2312 = vadd.f32 0.0, %v2311
        %v2313 = vpop.f32.mrb[0].mxu0
        %v2314 = vpop.f32.mrb[0].mxu0
        %v2315 = vadd.f32 0.0, %v2314
        %v2316 = vpop.f32.mrb[0].mxu0
        %2317 = vmatprep.mubr.bf16.mxu0 0
        %2318 = vmatmul.mubr.bf16.gmra.mrb[0].mxu0 %v2252
        %v2319 = vpop.f32.mrb[0].mxu0
        %v2320 = vadd.f32 0.0, %v2319
        %v2321 = vpop.f32.mrb[0].mxu0
        %v2322 = vpop.f32.mrb[0].mxu0
        %v2323 = vadd.f32 0.0, %v2322
        %v2324 = vpop.f32.mrb[0].mxu0
        %2325 = vmatprep.mubr.bf16.mxu0 0
        %2326 = vmatmul.mubr.bf16.gmra.mrb[0].mxu0 %v2255
        %v2327 = vpop.f32.mrb[0].mxu0
        %v2328 = vadd.f32 0.0, %v2327
        %v2329 = vpop.f32.mrb[0].mxu0
        %v2330 = vpop.f32.mrb[0].mxu0
        %v2331 = vadd.f32 0.0, %v2330
        %v2332 = vpop.f32.mrb[0].mxu0
        %2333 = vdwg.mxu0
        %v2334 = vsel %vm1712, %v2304, -inf
        %2335 = vmax.xlane.f32.xlu0 %v2334
        %v2336 = vpop.xlane.xlu0 %2335
        %v2337 = vsel %vm1712, %v2307, -inf
        %2338 = vmax.xlane.f32.xlu0 %v2337
        %v2339 = vpop.xlane.xlu0 %2338
        %v2340 = vsel %vm1712, %v2312, -inf
        %2341 = vmax.xlane.f32.xlu0 %v2340
        %v2342 = vpop.xlane.xlu0 %2341
        %v2343 = vsel %vm1712, %v2315, -inf
        %2344 = vmax.xlane.f32.xlu0 %v2343
        %v2345 = vpop.xlane.xlu0 %2344
        %v2346 = vsel %vm1712, %v2320, -inf
        %2347 = vmax.xlane.f32.xlu0 %v2346
        %v2348 = vpop.xlane.xlu0 %2347
        %v2349 = vsel %vm1712, %v2323, -inf
        %2350 = vmax.xlane.f32.xlu0 %v2349
        %v2351 = vpop.xlane.xlu0 %2350
        %v2352 = vsel %vm1712, %v2328, -inf
        %2353 = vmax.xlane.f32.xlu0 %v2352
        %v2354 = vpop.xlane.xlu0 %2353
        %v2355 = vsel %vm1712, %v2331, -inf
        %2356 = vmax.xlane.f32.xlu0 %v2355
        %v2357 = vpop.xlane.xlu0 %2356
        %v2358 = vsub.f32 %v2304, %v2336
        %v2359 = vsub.f32 %v2307, %v2339
        %v2360 = vsub.f32 %v2312, %v2342
        %v2361 = vsub.f32 %v2315, %v2345
        %v2362 = vsub.f32 %v2320, %v2348
        %v2363 = vsub.f32 %v2323, %v2351
        %v2364 = vsub.f32 %v2328, %v2354
        %v2365 = vsub.f32 %v2331, %v2357
        %v2366 = vmul.f32 %v2358, 1.442695
        %v2367 = vpow.pop %v2366
        %v2368 = vmul.f32 %v2359, 1.442695
        %v2369 = vpow.pop %v2368
        %v2370 = vmul.f32 %v2360, 1.442695
        %v2371 = vpow.pop %v2370
        %v2372 = vmul.f32 %v2361, 1.442695
        %v2373 = vpow.pop %v2372
        %v2374 = vmul.f32 %v2362, 1.442695
        %v2375 = vpow.pop %v2374
        %v2376 = vmul.f32 %v2363, 1.442695
        %v2377 = vpow.pop %v2376
        %v2378 = vmul.f32 %v2364, 1.442695
        %v2379 = vpow.pop %v2378
        %v2380 = vmul.f32 %v2365, 1.442695
        %v2381 = vpow.pop %v2380
        %v2382 = vsel %vm1712, %v2367, 0.0
        %2383 = vadd.xlane.f32.xlu0 %v2382
        %v2384 = vpop.xlane.xlu0 %2383
        %v2385 = vsel %vm1712, %v2369, 0.0
        %2386 = vadd.xlane.f32.xlu0 %v2385
        %v2387 = vpop.xlane.xlu0 %2386
        %v2388 = vsel %vm1712, %v2371, 0.0
        %2389 = vadd.xlane.f32.xlu0 %v2388
        %v2390 = vpop.xlane.xlu0 %2389
        %v2391 = vsel %vm1712, %v2373, 0.0
        %2392 = vadd.xlane.f32.xlu0 %v2391
        %v2393 = vpop.xlane.xlu0 %2392
        %v2394 = vsel %vm1712, %v2375, 0.0
        %2395 = vadd.xlane.f32.xlu0 %v2394
        %v2396 = vpop.xlane.xlu0 %2395
        %v2397 = vsel %vm1712, %v2377, 0.0
        %2398 = vadd.xlane.f32.xlu0 %v2397
        %v2399 = vpop.xlane.xlu0 %2398
        %v2400 = vsel %vm1712, %v2379, 0.0
        %2401 = vadd.xlane.f32.xlu0 %v2400
        %v2402 = vpop.xlane.xlu0 %2401
        %v2403 = vsel %vm1712, %v2381, 0.0
        %2404 = vadd.xlane.f32.xlu0 %v2403
        %v2405 = vpop.xlane.xlu0 %2404
        %v2406 = vpack.c.bf16 %v2369, %v2367
        %v2407 = vpack.c.bf16 %v2373, %v2371
        %v2408 = vpack.c.bf16 %v2377, %v2375
        %v2409 = vpack.c.bf16 %v2381, %v2379
        %2410 = vrot.lane.b32.xlu0 %v1606, 48
        %v2411 = vpop.permute.xlu0 %2410
        %2412 = vrot.lane.b32.xlu0 %v1607, 48
        %v2413 = vpop.permute.xlu0 %2412
        %2414 = vrot.lane.b32.xlu0 %v1608, 48
        %v2415 = vpop.permute.xlu0 %2414
        %2416 = vrot.lane.b32.xlu0 %v1609, 48
        %v2417 = vpop.permute.xlu0 %2416
        %v2423 = vsel %vm1712, %v2406, 0
        %v2426 = vsel %vm1712, %v2407, 0
        %v2429 = vsel %vm1712, %v2408, 0
        %v2432 = vsel %vm1712, %v2409, 0
        %2434 = vmatprep.subr.bf16.mxu0 0
        %2435 = vmatpush1.bf16.msra.mxu0 %v2411
        %2436 = vmatprep.subr.bf16.mxu0 0
        %2437 = vmatpush1.bf16.msra.mxu0 %v2413
        %2438 = vmatprep.subr.bf16.mxu0 0
        %2439 = vmatpush1.bf16.msra.mxu0 %v2415
        %2440 = vmatprep.subr.bf16.mxu0 0
        %2441 = vmatpush1.bf16.msra.mxu0 %v2417
        %2442 = vmatprep.subr.bf16.mxu0 0
        %2443 = vmatpush1.bf16.msra.mxu0 0
        %2444 = vmatprep.subr.bf16.mxu0 0
        %2445 = vmatpush1.bf16.msra.mxu0 0
        %2446 = vmatprep.subr.bf16.mxu0 0
        %2447 = vmatpush1.bf16.msra.mxu0 0
        %2448 = vmatprep.subr.bf16.mxu0 0
        %2449 = vmatpush1.bf16.msra.mxu0 0
        %2450 = vmatprep.subr.bf16.mxu0 0
        %2451 = vmatpush1.bf16.msra.mxu0 0
        %2452 = vmatprep.subr.bf16.mxu0 0
        %2453 = vmatpush1.bf16.msra.mxu0 0
        %2454 = vmatprep.subr.bf16.mxu0 0
        %2455 = vmatpush1.bf16.msra.mxu0 0
        %2456 = vmatprep.subr.bf16.mxu0 0
        %2457 = vmatpush1.bf16.msra.mxu0 0
        %2458 = vmatprep.subr.bf16.mxu0 0
        %2459 = vmatpush1.bf16.msra.mxu0 0
        %2460 = vmatprep.subr.bf16.mxu0 0
        %2461 = vmatpush1.bf16.msra.mxu0 0
        %2462 = vmatprep.subr.bf16.mxu0 0
        %2463 = vmatpush1.bf16.msra.mxu0 0
        %2464 = vmatprep.subr.bf16.mxu0 0
        %2465 = vmatpush1.bf16.msra.mxu0 0
        %2466 = vmatprep.mubr.bf16.mxu0 0
        %2467 = vmatmul.mubr.bf16.gmra.mrb[0].mxu0 %v2423
        %v2468 = vpop.f32.mrb[0].mxu0
        %v2469 = vadd.f32 0.0, %v2468
        %v2470 = vpop.f32.mrb[0].mxu0
        %v2471 = vpop.f32.mrb[0].mxu0
        %v2472 = vadd.f32 0.0, %v2471
        %v2473 = vpop.f32.mrb[0].mxu0
        %2474 = vmatprep.mubr.bf16.mxu0 0
        %2475 = vmatmul.mubr.bf16.gmra.mrb[0].mxu0 %v2426
        %v2476 = vpop.f32.mrb[0].mxu0
        %v2477 = vadd.f32 0.0, %v2476
        %v2478 = vpop.f32.mrb[0].mxu0
        %v2479 = vpop.f32.mrb[0].mxu0
        %v2480 = vadd.f32 0.0, %v2479
        %v2481 = vpop.f32.mrb[0].mxu0
        %2482 = vmatprep.mubr.bf16.mxu0 0
        %2483 = vmatmul.mubr.bf16.gmra.mrb[0].mxu0 %v2429
        %v2484 = vpop.f32.mrb[0].mxu0
        %v2485 = vadd.f32 0.0, %v2484
        %v2486 = vpop.f32.mrb[0].mxu0
        %v2487 = vpop.f32.mrb[0].mxu0
        %v2488 = vadd.f32 0.0, %v2487
        %v2489 = vpop.f32.mrb[0].mxu0
        %2490 = vmatprep.mubr.bf16.mxu0 0
        %2491 = vmatmul.mubr.bf16.gmra.mrb[0].mxu0 %v2432
        %v2492 = vpop.f32.mrb[0].mxu0
        %v2493 = vadd.f32 0.0, %v2492
        %v2494 = vpop.f32.mrb[0].mxu0
        %v2495 = vpop.f32.mrb[0].mxu0
        %v2496 = vadd.f32 0.0, %v2495
        %v2497 = vpop.f32.mrb[0].mxu0
        %2498 = vdwg.mxu0
        %v2499 = vrcp.pop %v2384
        %v2500 = vrcp.pop %v2387
        %v2501 = vrcp.pop %v2390
        %v2502 = vrcp.pop %v2393
        %v2503 = vrcp.pop %v2396
        %v2504 = vrcp.pop %v2399
        %v2505 = vrcp.pop %v2402
        %v2506 = vrcp.pop %v2405
        %v2507 = vmul.f32 %v2469, %v2499
        %v2508 = vmul.f32 %v2472, %v2500
        %v2509 = vmul.f32 %v2477, %v2501
        %v2510 = vmul.f32 %v2480, %v2502
        %v2511 = vmul.f32 %v2485, %v2503
        %v2512 = vmul.f32 %v2488, %v2504
        %v2513 = vmul.f32 %v2493, %v2505
        %v2514 = vmul.f32 %v2496, %v2506
        %2523 = vrot.lane.b32.xlu0 %v2507, 16
        %v2524 = vpop.permute.xlu0 %2523
        %2525 = vrot.lane.b32.xlu0 %v2508, 16
        %v2526 = vpop.permute.xlu0 %2525
        %2527 = vrot.lane.b32.xlu0 %v2509, 16
        %v2528 = vpop.permute.xlu0 %2527
        %2529 = vrot.lane.b32.xlu0 %v2510, 16
        %v2530 = vpop.permute.xlu0 %2529
        %2531 = vrot.lane.b32.xlu0 %v2511, 16
        %v2532 = vpop.permute.xlu0 %2531
        %2533 = vrot.lane.b32.xlu0 %v2512, 16
        %v2534 = vpop.permute.xlu0 %2533
        %2535 = vrot.lane.b32.xlu0 %v2513, 16
        %v2536 = vpop.permute.xlu0 %2535
        %2537 = vrot.lane.b32.xlu0 %v2514, 16
        %v2538 = vpop.permute.xlu0 %2537
        %vm2547 = vcmask 195712
        %2548 = vst.msk [vmem:[#allocation4] sm:$0xff] %vm2547, %v2524
        %2549 = vst.msk [vmem:[#allocation4 + $0x8] sm:$0xff] %vm2547, %v2526
        %2550 = vst.msk [vmem:[#allocation4 + $0x10] sm:$0xff] %vm2547, %v2528
        %2551 = vst.msk [vmem:[#allocation4 + $0x18] sm:$0xff] %vm2547, %v2530
        %2552 = vst.msk [vmem:[#allocation4 + $0x20] sm:$0xff] %vm2547, %v2532
        %2553 = vst.msk [vmem:[#allocation4 + $0x28] sm:$0xff] %vm2547, %v2534
        %2554 = vst.msk [vmem:[#allocation4 + $0x30] sm:$0xff] %vm2547, %v2536
        %2555 = vst.msk [vmem:[#allocation4 + $0x38] sm:$0xff] %vm2547, %v2538
        %2556 = vrot.lane.b32.xlu0 %v1606, 104
        %v2557 = vpop.permute.xlu0 %2556
        %2558 = vrot.lane.b32.xlu0 %v1607, 104
        %v2559 = vpop.permute.xlu0 %2558
        %2560 = vrot.lane.b32.xlu0 %v1608, 104
        %v2561 = vpop.permute.xlu0 %2560
        %2562 = vrot.lane.b32.xlu0 %v1609, 104
        %v2563 = vpop.permute.xlu0 %2562
        %2564 = vrot.lane.b32.xlu0 %v1606, 72
        %v2565 = vpop.permute.xlu0 %2564
        %2566 = vrot.lane.b32.xlu0 %v1607, 72
        %v2567 = vpop.permute.xlu0 %2566
        %2568 = vrot.lane.b32.xlu0 %v1608, 72
        %v2569 = vpop.permute.xlu0 %2568
        %2570 = vrot.lane.b32.xlu0 %v1609, 72
        %v2571 = vpop.permute.xlu0 %2570
        %v2573 = vsel %vm1622, %v2557, 0
        %v2576 = vsel %vm1622, %v2559, 0
        %v2579 = vsel %vm1622, %v2561, 0
        %v2582 = vsel %vm1622, %v2563, 0
        %v2585 = vsel %vm1622, %v2565, 0
        %v2588 = vsel %vm1622, %v2567, 0
        %v2591 = vsel %vm1622, %v2569, 0
        %v2594 = vsel %vm1622, %v2571, 0
        %2596 = vmatprep.subr.bf16.mxu0 0
        %2597 = vmatpush1.bf16.xpose.msra.mxu0 %v2585
        %2598 = vmatprep.subr.bf16.mxu0 0
        %2599 = vmatpush1.bf16.xpose.msra.mxu0 %v2588
        %2600 = vmatprep.subr.bf16.mxu0 0
        %2601 = vmatpush1.bf16.xpose.msra.mxu0 %v2591
        %2602 = vmatprep.subr.bf16.mxu0 0
        %2603 = vmatpush1.bf16.xpose.msra.mxu0 %v2594
        %2604 = vmatprep.subr.bf16.mxu0 0
        %2605 = vmatpush1.bf16.xpose.msra.mxu0 0
        %2606 = vmatprep.subr.bf16.mxu0 0
        %2607 = vmatpush1.bf16.xpose.msra.mxu0 0
        %2608 = vmatprep.subr.bf16.mxu0 0
        %2609 = vmatpush1.bf16.xpose.msra.mxu0 0
        %2610 = vmatprep.subr.bf16.mxu0 0
        %2611 = vmatpush1.bf16.xpose.msra.mxu0 0
        %2612 = vmatprep.subr.bf16.mxu0 0
        %2613 = vmatpush1.bf16.xpose.msra.mxu0 0
        %2614 = vmatprep.subr.bf16.mxu0 0
        %2615 = vmatpush1.bf16.xpose.msra.mxu0 0
        %2616 = vmatprep.subr.bf16.mxu0 0
        %2617 = vmatpush1.bf16.xpose.msra.mxu0 0
        %2618 = vmatprep.subr.bf16.mxu0 0
        %2619 = vmatpush1.bf16.xpose.msra.mxu0 0
        %2620 = vmatprep.subr.bf16.mxu0 0
        %2621 = vmatpush1.bf16.xpose.msra.mxu0 0
        %2622 = vmatprep.subr.bf16.mxu0 0
        %2623 = vmatpush1.bf16.xpose.msra.mxu0 0
        %2624 = vmatprep.subr.bf16.mxu0 0
        %2625 = vmatpush1.bf16.xpose.msra.mxu0 0
        %2626 = vmatprep.subr.bf16.mxu0 0
        %2627 = vmatpush1.bf16.xpose.msra.mxu0 0
        %2628 = vmatprep.mubr.bf16.mxu0 0
        %2629 = vmatmul.mubr.bf16.gmra.mrb[0].mxu0 %v2573
        %v2630 = vpop.f32.mrb[0].mxu0
        %v2631 = vadd.f32 0.0, %v2630
        %v2632 = vpop.f32.mrb[0].mxu0
        %v2633 = vpop.f32.mrb[0].mxu0
        %v2634 = vadd.f32 0.0, %v2633
        %v2635 = vpop.f32.mrb[0].mxu0
        %2636 = vmatprep.mubr.bf16.mxu0 0
        %2637 = vmatmul.mubr.bf16.gmra.mrb[0].mxu0 %v2576
        %v2638 = vpop.f32.mrb[0].mxu0
        %v2639 = vadd.f32 0.0, %v2638
        %v2640 = vpop.f32.mrb[0].mxu0
        %v2641 = vpop.f32.mrb[0].mxu0
        %v2642 = vadd.f32 0.0, %v2641
        %v2643 = vpop.f32.mrb[0].mxu0
        %2644 = vmatprep.mubr.bf16.mxu0 0
        %2645 = vmatmul.mubr.bf16.gmra.mrb[0].mxu0 %v2579
        %v2646 = vpop.f32.mrb[0].mxu0
        %v2647 = vadd.f32 0.0, %v2646
        %v2648 = vpop.f32.mrb[0].mxu0
        %v2649 = vpop.f32.mrb[0].mxu0
        %v2650 = vadd.f32 0.0, %v2649
        %v2651 = vpop.f32.mrb[0].mxu0
        %2652 = vmatprep.mubr.bf16.mxu0 0
        %2653 = vmatmul.mubr.bf16.gmra.mrb[0].mxu0 %v2582
        %v2654 = vpop.f32.mrb[0].mxu0
        %v2655 = vadd.f32 0.0, %v2654
        %v2656 = vpop.f32.mrb[0].mxu0
        %v2657 = vpop.f32.mrb[0].mxu0
        %v2658 = vadd.f32 0.0, %v2657
        %v2659 = vpop.f32.mrb[0].mxu0
        %2660 = vdwg.mxu0
        %v2661 = vsel %vm1712, %v2631, -inf
        %2662 = vmax.xlane.f32.xlu0 %v2661
        %v2663 = vpop.xlane.xlu0 %2662
        %v2664 = vsel %vm1712, %v2634, -inf
        %2665 = vmax.xlane.f32.xlu0 %v2664
        %v2666 = vpop.xlane.xlu0 %2665
        %v2667 = vsel %vm1712, %v2639, -inf
        %2668 = vmax.xlane.f32.xlu0 %v2667
        %v2669 = vpop.xlane.xlu0 %2668
        %v2670 = vsel %vm1712, %v2642, -inf
        %2671 = vmax.xlane.f32.xlu0 %v2670
        %v2672 = vpop.xlane.xlu0 %2671
        %v2673 = vsel %vm1712, %v2647, -inf
        %2674 = vmax.xlane.f32.xlu0 %v2673
        %v2675 = vpop.xlane.xlu0 %2674
        %v2676 = vsel %vm1712, %v2650, -inf
        %2677 = vmax.xlane.f32.xlu0 %v2676
        %v2678 = vpop.xlane.xlu0 %2677
        %v2679 = vsel %vm1712, %v2655, -inf
        %2680 = vmax.xlane.f32.xlu0 %v2679
        %v2681 = vpop.xlane.xlu0 %2680
        %v2682 = vsel %vm1712, %v2658, -inf
        %2683 = vmax.xlane.f32.xlu0 %v2682
        %v2684 = vpop.xlane.xlu0 %2683
        %v2685 = vsub.f32 %v2631, %v2663
        %v2686 = vsub.f32 %v2634, %v2666
        %v2687 = vsub.f32 %v2639, %v2669
        %v2688 = vsub.f32 %v2642, %v2672
        %v2689 = vsub.f32 %v2647, %v2675
        %v2690 = vsub.f32 %v2650, %v2678
        %v2691 = vsub.f32 %v2655, %v2681
        %v2692 = vsub.f32 %v2658, %v2684
        %v2693 = vmul.f32 %v2685, 1.442695
        %v2694 = vpow.pop %v2693
        %v2695 = vmul.f32 %v2686, 1.442695
        %v2696 = vpow.pop %v2695
        %v2697 = vmul.f32 %v2687, 1.442695
        %v2698 = vpow.pop %v2697
        %v2699 = vmul.f32 %v2688, 1.442695
        %v2700 = vpow.pop %v2699
        %v2701 = vmul.f32 %v2689, 1.442695
        %v2702 = vpow.pop %v2701
        %v2703 = vmul.f32 %v2690, 1.442695
        %v2704 = vpow.pop %v2703
        %v2705 = vmul.f32 %v2691, 1.442695
        %v2706 = vpow.pop %v2705
        %v2707 = vmul.f32 %v2692, 1.442695
        %v2708 = vpow.pop %v2707
        %v2709 = vsel %vm1712, %v2694, 0.0
        %2710 = vadd.xlane.f32.xlu0 %v2709
        %v2711 = vpop.xlane.xlu0 %2710
        %v2712 = vsel %vm1712, %v2696, 0.0
        %2713 = vadd.xlane.f32.xlu0 %v2712
        %v2714 = vpop.xlane.xlu0 %2713
        %v2715 = vsel %vm1712, %v2698, 0.0
        %2716 = vadd.xlane.f32.xlu0 %v2715
        %v2717 = vpop.xlane.xlu0 %2716
        %v2718 = vsel %vm1712, %v2700, 0.0
        %2719 = vadd.xlane.f32.xlu0 %v2718
        %v2720 = vpop.xlane.xlu0 %2719
        %v2721 = vsel %vm1712, %v2702, 0.0
        %2722 = vadd.xlane.f32.xlu0 %v2721
        %v2723 = vpop.xlane.xlu0 %2722
        %v2724 = vsel %vm1712, %v2704, 0.0
        %2725 = vadd.xlane.f32.xlu0 %v2724
        %v2726 = vpop.xlane.xlu0 %2725
        %v2727 = vsel %vm1712, %v2706, 0.0
        %2728 = vadd.xlane.f32.xlu0 %v2727
        %v2729 = vpop.xlane.xlu0 %2728
        %v2730 = vsel %vm1712, %v2708, 0.0
        %2731 = vadd.xlane.f32.xlu0 %v2730
        %v2732 = vpop.xlane.xlu0 %2731
        %v2733 = vpack.c.bf16 %v2696, %v2694
        %v2734 = vpack.c.bf16 %v2700, %v2698
        %v2735 = vpack.c.bf16 %v2704, %v2702
        %v2736 = vpack.c.bf16 %v2708, %v2706
        %2737 = vrot.lane.b32.xlu0 %v1606, 40
        %v2738 = vpop.permute.xlu0 %2737
        %2739 = vrot.lane.b32.xlu0 %v1607, 40
        %v2740 = vpop.permute.xlu0 %2739
        %2741 = vrot.lane.b32.xlu0 %v1608, 40
        %v2742 = vpop.permute.xlu0 %2741
        %2743 = vrot.lane.b32.xlu0 %v1609, 40
        %v2744 = vpop.permute.xlu0 %2743
        %v2750 = vsel %vm1712, %v2733, 0
        %v2753 = vsel %vm1712, %v2734, 0
        %v2756 = vsel %vm1712, %v2735, 0
        %v2759 = vsel %vm1712, %v2736, 0
        %2761 = vmatprep.subr.bf16.mxu0 0
        %2762 = vmatpush1.bf16.msra.mxu0 %v2738
        %2763 = vmatprep.subr.bf16.mxu0 0
        %2764 = vmatpush1.bf16.msra.mxu0 %v2740
        %2765 = vmatprep.subr.bf16.mxu0 0
        %2766 = vmatpush1.bf16.msra.mxu0 %v2742
        %2767 = vmatprep.subr.bf16.mxu0 0
        %2768 = vmatpush1.bf16.msra.mxu0 %v2744
        %2769 = vmatprep.subr.bf16.mxu0 0
        %2770 = vmatpush1.bf16.msra.mxu0 0
        %2771 = vmatprep.subr.bf16.mxu0 0
        %2772 = vmatpush1.bf16.msra.mxu0 0
        %2773 = vmatprep.subr.bf16.mxu0 0
        %2774 = vmatpush1.bf16.msra.mxu0 0
        %2775 = vmatprep.subr.bf16.mxu0 0
        %2776 = vmatpush1.bf16.msra.mxu0 0
        %2777 = vmatprep.subr.bf16.mxu0 0
        %2778 = vmatpush1.bf16.msra.mxu0 0
        %2779 = vmatprep.subr.bf16.mxu0 0
        %2780 = vmatpush1.bf16.msra.mxu0 0
        %2781 = vmatprep.subr.bf16.mxu0 0
        %2782 = vmatpush1.bf16.msra.mxu0 0
        %2783 = vmatprep.subr.bf16.mxu0 0
        %2784 = vmatpush1.bf16.msra.mxu0 0
        %2785 = vmatprep.subr.bf16.mxu0 0
        %2786 = vmatpush1.bf16.msra.mxu0 0
        %2787 = vmatprep.subr.bf16.mxu0 0
        %2788 = vmatpush1.bf16.msra.mxu0 0
        %2789 = vmatprep.subr.bf16.mxu0 0
        %2790 = vmatpush1.bf16.msra.mxu0 0
        %2791 = vmatprep.subr.bf16.mxu0 0
        %2792 = vmatpush1.bf16.msra.mxu0 0
        %2793 = vmatprep.mubr.bf16.mxu0 0
        %2794 = vmatmul.mubr.bf16.gmra.mrb[0].mxu0 %v2750
        %v2795 = vpop.f32.mrb[0].mxu0
        %v2796 = vadd.f32 0.0, %v2795
        %v2797 = vpop.f32.mrb[0].mxu0
        %v2798 = vpop.f32.mrb[0].mxu0
        %v2799 = vadd.f32 0.0, %v2798
        %v2800 = vpop.f32.mrb[0].mxu0
        %2801 = vmatprep.mubr.bf16.mxu0 0
        %2802 = vmatmul.mubr.bf16.gmra.mrb[0].mxu0 %v2753
        %v2803 = vpop.f32.mrb[0].mxu0
        %v2804 = vadd.f32 0.0, %v2803
        %v2805 = vpop.f32.mrb[0].mxu0
        %v2806 = vpop.f32.mrb[0].mxu0
        %v2807 = vadd.f32 0.0, %v2806
        %v2808 = vpop.f32.mrb[0].mxu0
        %2809 = vmatprep.mubr.bf16.mxu0 0
        %2810 = vmatmul.mubr.bf16.gmra.mrb[0].mxu0 %v2756
        %v2811 = vpop.f32.mrb[0].mxu0
        %v2812 = vadd.f32 0.0, %v2811
        %v2813 = vpop.f32.mrb[0].mxu0
        %v2814 = vpop.f32.mrb[0].mxu0
        %v2815 = vadd.f32 0.0, %v2814
        %v2816 = vpop.f32.mrb[0].mxu0
        %2817 = vmatprep.mubr.bf16.mxu0 0
        %2818 = vmatmul.mubr.bf16.gmra.mrb[0].mxu0 %v2759
        %v2819 = vpop.f32.mrb[0].mxu0
        %v2820 = vadd.f32 0.0, %v2819
        %v2821 = vpop.f32.mrb[0].mxu0
        %v2822 = vpop.f32.mrb[0].mxu0
        %v2823 = vadd.f32 0.0, %v2822
        %v2824 = vpop.f32.mrb[0].mxu0
        %2825 = vdwg.mxu0
        %v2826 = vrcp.pop %v2711
        %v2827 = vrcp.pop %v2714
        %v2828 = vrcp.pop %v2717
        %v2829 = vrcp.pop %v2720
        %v2830 = vrcp.pop %v2723
        %v2831 = vrcp.pop %v2726
        %v2832 = vrcp.pop %v2729
        %v2833 = vrcp.pop %v2732
        %v2834 = vmul.f32 %v2796, %v2826
        %v2835 = vmul.f32 %v2799, %v2827
        %v2836 = vmul.f32 %v2804, %v2828
        %v2837 = vmul.f32 %v2807, %v2829
        %v2838 = vmul.f32 %v2812, %v2830
        %v2839 = vmul.f32 %v2815, %v2831
        %v2840 = vmul.f32 %v2820, %v2832
        %v2841 = vmul.f32 %v2823, %v2833
        %2850 = vrot.lane.b32.xlu0 %v2834, 24
        %v2851 = vpop.permute.xlu0 %2850
        %2852 = vrot.lane.b32.xlu0 %v2835, 24
        %v2853 = vpop.permute.xlu0 %2852
        %2854 = vrot.lane.b32.xlu0 %v2836, 24
        %v2855 = vpop.permute.xlu0 %2854
        %2856 = vrot.lane.b32.xlu0 %v2837, 24
        %v2857 = vpop.permute.xlu0 %2856
        %2858 = vrot.lane.b32.xlu0 %v2838, 24
        %v2859 = vpop.permute.xlu0 %2858
        %2860 = vrot.lane.b32.xlu0 %v2839, 24
        %v2861 = vpop.permute.xlu0 %2860
        %2862 = vrot.lane.b32.xlu0 %v2840, 24
        %v2863 = vpop.permute.xlu0 %2862
        %2864 = vrot.lane.b32.xlu0 %v2841, 24
        %v2865 = vpop.permute.xlu0 %2864
        %vm2874 = vcmask 261312
        %2875 = vst.msk [vmem:[#allocation4] sm:$0xff] %vm2874, %v2851
        %2876 = vst.msk [vmem:[#allocation4 + $0x8] sm:$0xff] %vm2874, %v2853
        %2877 = vst.msk [vmem:[#allocation4 + $0x10] sm:$0xff] %vm2874, %v2855
        %2878 = vst.msk [vmem:[#allocation4 + $0x18] sm:$0xff] %vm2874, %v2857
        %2879 = vst.msk [vmem:[#allocation4 + $0x20] sm:$0xff] %vm2874, %v2859
        %2880 = vst.msk [vmem:[#allocation4 + $0x28] sm:$0xff] %vm2874, %v2861
        %2881 = vst.msk [vmem:[#allocation4 + $0x30] sm:$0xff] %vm2874, %v2863
        %2882 = vst.msk [vmem:[#allocation4 + $0x38] sm:$0xff] %vm2874, %v2865
        %v2883 = vld [vmem:[#allocation4] sm:$0xff]
        %v2884 = vld [vmem:[#allocation4 + $0x8] sm:$0xff]
        %v2885 = vld [vmem:[#allocation4 + $0x10] sm:$0xff]
        %v2886 = vld [vmem:[#allocation4 + $0x18] sm:$0xff]
        %v2887 = vld [vmem:[#allocation4 + $0x20] sm:$0xff]
        %v2888 = vld [vmem:[#allocation4 + $0x28] sm:$0xff]
        %v2889 = vld [vmem:[#allocation4 + $0x30] sm:$0xff]
        %v2890 = vld [vmem:[#allocation4 + $0x38] sm:$0xff]
        %v2891 = vpack.c.bf16 %v2884, %v2883
        %v2892 = vpack.c.bf16 %v2886, %v2885
        %v2893 = vpack.c.bf16 %v2888, %v2887
        %v2894 = vpack.c.bf16 %v2890, %v2889
        %v2895 = vld [vmem:[#allocation9] sm:$0xf]
        %v2896 = vld [vmem:[#allocation9 + $0x4] sm:$0xf]
        %v2897 = vld [vmem:[#allocation9 + $0x8] sm:$0xf]
        %v2898 = vld [vmem:[#allocation9 + $0xc] sm:$0xf]
        %v2899 = vld [vmem:[%s3] sm:$0x1]
        %v2901 = vlaneseq
        %v2902 = vshrl.u32 %v2901, 7
        %v2903 = vsub.s32 0, %v2902
        %v2904 = vrot.slane %v2899, %v2903
        %v2910 = vunpack.c.l.b16 %v2895
        %v2911 = vunpack.c.l.b16 %v2896
        %v2912 = vunpack.c.l.b16 %v2897
        %v2913 = vunpack.c.l.b16 %v2898
        %v2914 = vpack.c.b16 %v2911, %v2910
        %v2915 = vpack.c.b16 %v2913, %v2912
        %v2919 = vsel %vm477, %v2891, 0
        %v2922 = vsel %vm477, %v2892, 0
        %v2925 = vsel %vm477, %v2893, 0
        %v2928 = vsel %vm477, %v2894, 0
        %2930 = vmatprep.subr.bf16.mxu0 0
        %2931 = vmatpush1.bf16.msra.mxu0 %v2914
        %2932 = vmatprep.subr.bf16.mxu0 0
        %2933 = vmatpush1.bf16.msra.mxu0 %v2915
        %2934 = vmatprep.subr.bf16.mxu0 0
        %2935 = vmatpush1.bf16.msra.mxu0 0
        %2936 = vmatprep.subr.bf16.mxu0 0
        %2937 = vmatpush1.bf16.msra.mxu0 0
        %2938 = vmatprep.subr.bf16.mxu0 0
        %2939 = vmatpush1.bf16.msra.mxu0 0
        %2940 = vmatprep.subr.bf16.mxu0 0
        %2941 = vmatpush1.bf16.msra.mxu0 0
        %2942 = vmatprep.subr.bf16.mxu0 0
        %2943 = vmatpush1.bf16.msra.mxu0 0
        %2944 = vmatprep.subr.bf16.mxu0 0
        %2945 = vmatpush1.bf16.msra.mxu0 0
        %2946 = vmatprep.subr.bf16.mxu0 0
        %2947 = vmatpush1.bf16.msra.mxu0 0
        %2948 = vmatprep.subr.bf16.mxu0 0
        %2949 = vmatpush1.bf16.msra.mxu0 0
        %2950 = vmatprep.subr.bf16.mxu0 0
        %2951 = vmatpush1.bf16.msra.mxu0 0
        %2952 = vmatprep.subr.bf16.mxu0 0
        %2953 = vmatpush1.bf16.msra.mxu0 0
        %2954 = vmatprep.subr.bf16.mxu0 0
        %2955 = vmatpush1.bf16.msra.mxu0 0
        %2956 = vmatprep.subr.bf16.mxu0 0
        %2957 = vmatpush1.bf16.msra.mxu0 0
        %2958 = vmatprep.subr.bf16.mxu0 0
        %2959 = vmatpush1.bf16.msra.mxu0 0
        %2960 = vmatprep.subr.bf16.mxu0 0
        %2961 = vmatpush1.bf16.msra.mxu0 0
        %2962 = vmatprep.mubr.bf16.mxu0 0
        %2963 = vmatmul.mubr.bf16.gmra.mrb[0].mxu0 %v2919
        %v2964 = vpop.f32.mrb[0].mxu0
        %v2965 = vadd.f32 %v2904, %v2964
        %v2966 = vpop.f32.mrb[0].mxu0
        %v2967 = vpop.f32.mrb[0].mxu0
        %v2968 = vadd.f32 %v2904, %v2967
        %v2969 = vpop.f32.mrb[0].mxu0
        %2970 = vmatprep.mubr.bf16.mxu0 0
        %2971 = vmatmul.mubr.bf16.gmra.mrb[0].mxu0 %v2922
        %v2972 = vpop.f32.mrb[0].mxu0
        %v2973 = vadd.f32 %v2904, %v2972
        %v2974 = vpop.f32.mrb[0].mxu0
        %v2975 = vpop.f32.mrb[0].mxu0
        %v2976 = vadd.f32 %v2904, %v2975
        %v2977 = vpop.f32.mrb[0].mxu0
        %2978 = vmatprep.mubr.bf16.mxu0 0
        %2979 = vmatmul.mubr.bf16.gmra.mrb[0].mxu0 %v2925
        %v2980 = vpop.f32.mrb[0].mxu0
        %v2981 = vadd.f32 %v2904, %v2980
        %v2982 = vpop.f32.mrb[0].mxu0
        %v2983 = vpop.f32.mrb[0].mxu0
        %v2984 = vadd.f32 %v2904, %v2983
        %v2985 = vpop.f32.mrb[0].mxu0
        %2986 = vmatprep.mubr.bf16.mxu0 0
        %2987 = vmatmul.mubr.bf16.gmra.mrb[0].mxu0 %v2928
        %v2988 = vpop.f32.mrb[0].mxu0
        %v2989 = vadd.f32 %v2904, %v2988
        %v2990 = vpop.f32.mrb[0].mxu0
        %v2991 = vpop.f32.mrb[0].mxu0
        %v2992 = vadd.f32 %v2904, %v2991
        %v2993 = vpop.f32.mrb[0].mxu0
        %2994 = vdwg.mxu0
        %2995 = vst.msk [vmem:[%s246] sm:$0xff] %vm477, %v2965
        %2996 = vst.msk [vmem:[%s246 + $0x8] sm:$0xff] %vm477, %v2968
        %2997 = vst.msk [vmem:[%s246 + $0x10] sm:$0xff] %vm477, %v2973
        %2998 = vst.msk [vmem:[%s246 + $0x18] sm:$0xff] %vm477, %v2976
        %2999 = vst.msk [vmem:[%s246 + $0x20] sm:$0xff] %vm477, %v2981
        %3000 = vst.msk [vmem:[%s246 + $0x28] sm:$0xff] %vm477, %v2984
        %3001 = vst.msk [vmem:[%s246 + $0x30] sm:$0xff] %vm477, %v2989
        %3002 = vst.msk [vmem:[%s246 + $0x38] sm:$0xff] %vm477, %v2992
        %p3003 = scmp.lt.s32.totalorder %s19, 1
        %s3004 = scalar_select %p3003, %s19, 1
        %s3005 = smul.addr %s3004, 8
        %s3006 = smul.addr %s3005, 8
        %s3007 = scalar_lea.vmem %s4, %s3006
        // Predicated region
        $region49: #{tpu_custom_call.1} parent=35 // pred_check
          %p3008 = pneg %p126
        $region50: #{tpu_custom_call.1} parent=35 // pred_check_branch
          %3010 = sbr.rel (%p3008) target = $region52
        $region51: #{tpu_custom_call.1} parent=35 // pred_region
          _
        $region52: #{tpu_custom_call.1} parent=35 // pred_fallthru
          _
      $region36: #{tpu_custom_call.1} parent=5 // pred_fallthru
        _
      %p3011 = scmp.le.s32.totalorder 2, %s14
      // Predicated region
      $region53: #{tpu_custom_call.1} parent=5 // pred_check
        %p3012 = pneg %p3011
      $region54: #{tpu_custom_call.1} parent=5 // pred_check_branch
        %3014 = sbr.rel (%p3012) target = $region56
      $region55: #{tpu_custom_call.1} parent=5 // pred_region
        %s3015 = ssub.s32 %s14, 2
        // Predicated region
        $region57: #{tpu_custom_call.1} parent=55 // pred_check
          %p3016 = pneg %p132
        $region58: #{tpu_custom_call.1} parent=55 // pred_check_branch
          %3018 = sbr.rel (%p3016) target = $region60
        $region59: #{tpu_custom_call.1} parent=55 // pred_region
          %p3019 = scmp.lt.s32.totalorder %s20, 1
          %s3020 = scalar_select %p3019, %s20, 1
          %s3021 = smul.addr %s3020, 8
          %s3022 = smul.addr %s3021, 8
          %s3023 = scalar_lea.vmem %s4, %s3022
        $region60: #{tpu_custom_call.1} parent=55 // pred_fallthru
          _
      $region56: #{tpu_custom_call.1} parent=5 // pred_fallthru
        _
    $region6: #{tpu_custom_call.1} parent=1 // loop_footer
      %s18 = sadd.s32 1, %s14
    $region7: #{tpu_custom_call.1} parent=1 // loop_footer_branch
      %13 = sbr.rel target = $region3
    $region8: #{tpu_custom_call.1} parent=1 // loop_exit
      _
    %3024 = vsyncpa [#allocation6], 1
    %s3025 = scalar_lea.sflag [#allocation6], 1
    %3026 = vsyncpa %s3025, 1
    %3027 = vsyncpa [#allocation8], 1

</llo_original>
